<compile_context>
chip_gen: v5e
topology: v5e:2x2
jax: 0.10.0
libtpu: 0.0.40
codegen_flags: <defaults>
</compile_context>

<pallas_src>
import functools

import jax
import jax.numpy as jnp
from jax.experimental import pallas as pl
from jax.experimental.pallas import tpu as pltpu


# ---------------------------------------------------------------------------
# helpers
# ---------------------------------------------------------------------------
def _round_up(a, b):
    return (a + b - 1) // b * b


def _pad2(a, rows, cols):
    return jnp.pad(a, ((0, rows - a.shape[0]), (0, cols - a.shape[1])))


# ---------------------------------------------------------------------------
# Pallas kernels
# ---------------------------------------------------------------------------
def gin_pass1_kernel(kidx_ref, nnz_ref, ahat_ref, x_ref, w1_ref, b1_ref,
                     w2_ref, b2_ref, y_ref, stats_ref, acc_ref, *, tm, n_real):
    """Block-sparse GIN aggregation (Ahat @ x) + MLP + ReLU + masked BN stats.

    grid = (M node tiles [parallel], compacted K tiles [arbitrary]).
    kidx/nnz are scalar-prefetch (SMEM): kidx[m, j] is the j-th nonzero K tile
    of row-tile m (repeated past nnz[m] so the DMA dedups); nnz[m] gates compute.
    """
    m = pl.program_id(0)
    j = pl.program_id(1)
    nj = pl.num_programs(1)

    @pl.when(j == 0)
    def _():
        acc_ref[...] = jnp.zeros_like(acc_ref)

    # bf16 x bf16 MXU matmul, f32 accumulation; skipped on zero Ahat tiles.
    @pl.when(j < nnz_ref[m])
    def _():
        acc_ref[...] += jnp.dot(ahat_ref[...], x_ref[...],
                                preferred_element_type=jnp.float32)

    @pl.when(j == nj - 1)
    def _():
        # MLP: Linear -> ReLU -> Linear  (bf16 MXU, f32 accumulate/bias/ReLU)
        h = jnp.dot(acc_ref[...].astype(jnp.bfloat16), w1_ref[...],
                    preferred_element_type=jnp.float32) + b1_ref[...]
        h = jnp.maximum(h, 0.0)
        h = jnp.dot(h.astype(jnp.bfloat16), w2_ref[...],
                    preferred_element_type=jnp.float32) + b2_ref[...]
        y = jnp.maximum(h, 0.0)            # outer F.relu in forward()
        y_ref[...] = y

        # masked partial BatchNorm statistics (exclude padded node rows);
        # mask built in-kernel from iota vs the static real node count.
        row = m * tm + jax.lax.broadcasted_iota(jnp.int32, (tm, 1), 0)
        mask = (row < n_real).astype(jnp.float32)
        ym = y * mask
        stats_ref[0, 0:1, :] = jnp.sum(ym, axis=0, keepdims=True)
        stats_ref[0, 1:2, :] = jnp.sum(ym * ym, axis=0, keepdims=True)


def bn_apply_pool_kernel(y_ref, scale_ref, shift_ref, pool_ref, _slab_hbm_ref,
                         slab_ref, xbf_ref, gpart_ref):
    """BN apply (y*scale+shift) written to the layer's slab column block and a
    bf16 copy (next layer's x), with a fused per-tile global_add_pool partial.
    The aliased slab input (_slab_hbm_ref) is never read (memory_space=ANY)."""
    yb = y_ref[...] * scale_ref[...] + shift_ref[...]
    slab_ref[...] = yb
    xbf_ref[...] = yb.astype(jnp.bfloat16)
    gpart_ref[0] = jnp.dot(pool_ref[...], yb,
                           preferred_element_type=jnp.float32)


# ---------------------------------------------------------------------------
# GConv forward (glue in plain JAX, hot path in Pallas)
# ---------------------------------------------------------------------------
def gconv_forward(params, x, edge_index, batch, *, num_graphs, tm=512, tk=512):
    layers = params["layers"]
    num_layers = len(layers)
    n_nodes, d_in = x.shape
    hidden = layers[0]["w2"].shape[1]

    hpad = _round_up(hidden, 128)
    gpad = _round_up(num_graphs, 8)

    # --- tiling ---------------------------------------------------------------
    npad128 = _round_up(n_nodes, 128)
    tm = min(tm, npad128)
    tk = min(tk, npad128)
    tile = max(tm, tk)
    assert tile % tm == 0 and tile % tk == 0, "tm/tk must divide each other"
    npad = _round_up(n_nodes, tile)
    # v7x megacore: keep >= 2 M tiles so both TensorCores get work.
    if npad // tm < 2 and (npad // 2) % 128 == 0:
        tm = npad // 2
    num_m = npad // tm
    num_k = npad // tk

    # --- Ahat = A + I built once, at padded shape, in bf16 (values exact) ------
    src = edge_index[0].astype(jnp.int32)
    dst = edge_index[1].astype(jnp.int32)
    diag = jnp.arange(n_nodes, dtype=jnp.int32)
    rows = jnp.concatenate([dst, diag])
    cols = jnp.concatenate([src, diag])
    ahat = jnp.zeros((npad, npad), jnp.bfloat16).at[rows, cols].add(
        jnp.ones(rows.shape, jnp.bfloat16))

    # --- block-sparsity map over (tm x tk) tiles, built O(E) from the edges ----
    tilemap = jnp.zeros((num_m, num_k), jnp.int32).at[rows // tm,
                                                      cols // tk].add(1)
    nz = tilemap > 0
    nnz = jnp.sum(nz, axis=1).astype(jnp.int32)                     # (num_m,)
    # compacted nonzero K-tile indices (nonzero tiles first, in k order)
    key = jnp.where(nz, 0, num_k) + jnp.arange(num_k, dtype=jnp.int32)[None, :]
    order = jnp.argsort(key, axis=1).astype(jnp.int32)
    last = jnp.take_along_axis(order, jnp.maximum(nnz - 1, 0)[:, None], axis=1)
    kidx = jnp.where(jnp.arange(num_k)[None, :] < nnz[:, None], order,
                     last).astype(jnp.int32)

    # --- inputs / persistent buffers -------------------------------------------
    dpad0 = _round_up(d_in, 128)
    x_cur = jnp.pad(x.astype(jnp.float32),
                    ((0, npad - n_nodes), (0, dpad0 - d_in))
                    ).astype(jnp.bfloat16)                 # bf16 stream for pass 1

    # preallocated lane-dense concat slab [Npad, Hpad * L] (f32 final z)
    slab = jnp.zeros((npad, hpad * num_layers), jnp.float32)

    batch_pad = jnp.pad(batch.astype(jnp.int32), (0, npad - n_nodes),
                        constant_values=-1)
    pool_mat = (batch_pad[None, :] ==
                jnp.arange(gpad, dtype=jnp.int32)[:, None]).astype(jnp.float32)

    cp_mm = pltpu.CompilerParams(
        dimension_semantics=("parallel", "arbitrary"),
        vmem_limit_bytes=48 * 1024 * 1024,   # v7x-safe ceiling; ample for v5e/v6e
    )
    cp_bn = pltpu.CompilerParams(dimension_semantics=("parallel",))

    g_layers = []
    for layer_idx, p in enumerate(layers):
        d_l = p["w1"].shape[0]
        dpad = _round_up(d_l, 128)
        w1 = _pad2(p["w1"], dpad, hpad).astype(jnp.bfloat16)
        b1 = _pad2(p["b1"], 1, hpad)
        w2 = _pad2(p["w2"], hpad, hpad).astype(jnp.bfloat16)
        b2 = _pad2(p["b2"], 1, hpad)
        gamma = _pad2(p["gamma"], 1, hpad)   # zero-padded -> padded cols stay 0
        beta = _pad2(p["beta"], 1, hpad)

        y, stats = pl.pallas_call(
            functools.partial(gin_pass1_kernel, tm=tm, n_real=n_nodes),
            grid_spec=pltpu.PrefetchScalarGridSpec(
                num_scalar_prefetch=2,
                grid=(num_m, num_k),
                in_specs=[
                    # ahat tile: only nonzero K tiles are visited
                    pl.BlockSpec((tm, tk),
                                 lambda m, j, kidx, nnz: (m, kidx[m, j])),
                    # x tile (bf16): follows the same compacted K schedule
                    pl.BlockSpec((tk, dpad),
                                 lambda m, j, kidx, nnz: (kidx[m, j], 0)),
                    pl.BlockSpec((dpad, hpad), lambda m, j, kidx, nnz: (0, 0)),
                    pl.BlockSpec((1, hpad), lambda m, j, kidx, nnz: (0, 0)),
                    pl.BlockSpec((hpad, hpad), lambda m, j, kidx, nnz: (0, 0)),
                    pl.BlockSpec((1, hpad), lambda m, j, kidx, nnz: (0, 0)),
                ],
                out_specs=[
                    pl.BlockSpec((tm, hpad), lambda m, j, kidx, nnz: (m, 0)),
                    pl.BlockSpec((1, 2, hpad),
                                 lambda m, j, kidx, nnz: (m, 0, 0)),
                ],
                scratch_shapes=[pltpu.VMEM((tm, dpad), jnp.float32)],
            ),
            out_shape=[
                jax.ShapeDtypeStruct((npad, hpad), jnp.float32),
                jax.ShapeDtypeStruct((num_m, 2, hpad), jnp.float32),
            ],
            compiler_params=cp_mm,
        )(kidx, nnz, ahat, x_cur, w1, b1, w2, b2)

        # finalize BN batch statistics (tiny [2, Hpad] math) over real nodes only
        s = jnp.sum(stats, axis=0)                                   # (2, Hpad)
        mean = s[0] / n_nodes
        var = jnp.maximum(s[1] / n_nodes - mean * mean, 0.0)         # biased var
        scale = gamma * jax.lax.rsqrt(var + 1e-5)                    # (1, Hpad)
        shift = beta - mean * scale                                  # (1, Hpad)

        slab, x_cur, gpart = pl.pallas_call(
            bn_apply_pool_kernel,
            grid=(num_m,),
            in_specs=[
                pl.BlockSpec((tm, hpad), lambda m: (m, 0)),           # y
                pl.BlockSpec((1, hpad), lambda m: (0, 0)),            # scale
                pl.BlockSpec((1, hpad), lambda m: (0, 0)),            # shift
                pl.BlockSpec((gpad, tm), lambda m: (0, m)),           # pool tile
                pl.BlockSpec(memory_space=pl.ANY),                    # slab alias (no DMA)
            ],
            out_specs=[
                pl.BlockSpec((tm, hpad), lambda m, _c=layer_idx: (m, _c)),
                pl.BlockSpec((tm, hpad), lambda m: (m, 0)),           # bf16 next x
                pl.BlockSpec((1, gpad, hpad), lambda m: (m, 0, 0)),   # pool partial
            ],
            out_shape=[
                jax.ShapeDtypeStruct((npad, hpad * num_layers), jnp.float32),
                jax.ShapeDtypeStruct((npad, hpad), jnp.bfloat16),
                jax.ShapeDtypeStruct((num_m, gpad, hpad), jnp.float32),
            ],
            input_output_aliases={4: 0},
            compiler_params=cp_bn,
        )(y, scale, shift, pool_mat, slab)

        g_layers.append(jnp.sum(gpart, axis=0))                      # (gpad, Hpad)

    # strip padding (rows beyond N, lane padding beyond hidden per layer)
    z = jnp.concatenate(
        [slab[:n_nodes, l * hpad: l * hpad + hidden] for l in range(num_layers)],
        axis=1)
    g = jnp.concatenate([gl[:num_graphs, :hidden] for gl in g_layers], axis=1)
    return z, g


def init_params(key, input_dim, hidden_dim, num_layers):
    """Deterministic parameter init (shapes match the PyTorch module)."""
    layers = []
    in_dim = input_dim
    for _ in range(num_layers):
        key, k1, k2 = jax.random.split(key, 3)
        layers.append({
            # Linear weights stored as [in, out] so the kernel does x @ W
            "w1": (jax.random.normal(k1, (in_dim, hidden_dim), jnp.float32)
                   * (1.0 / jnp.sqrt(in_dim))),
            "b1": jnp.zeros((1, hidden_dim), jnp.float32),
            "w2": (jax.random.normal(k2, (hidden_dim, hidden_dim), jnp.float32)
                   * (1.0 / jnp.sqrt(hidden_dim))),
            "b2": jnp.zeros((1, hidden_dim), jnp.float32),
            # BatchNorm1d affine params (default init: gamma=1, beta=0)
            "gamma": jnp.ones((1, hidden_dim), jnp.float32),
            "beta": jnp.zeros((1, hidden_dim), jnp.float32),
        })
        in_dim = hidden_dim
    return {"layers": layers}


if __name__ == "__main__":
    key = jax.random.PRNGKey(0)

    N = 200           # nodes
    INPUT_DIM = 8
    HIDDEN_DIM = 32
    NUM_LAYERS = 2
    NUM_GRAPHS = 2
    E = 600           # directed edges

    key, kx, ke = jax.random.split(key, 3)
    x = jax.random.normal(kx, (N, INPUT_DIM), jnp.float32)
    edge_index = jax.random.randint(ke, (2, E), 0, N, dtype=jnp.int32)
    batch = jnp.concatenate([jnp.zeros((N // 2,), jnp.int32),
                             jnp.ones((N - N // 2,), jnp.int32)])

    params = init_params(key, INPUT_DIM, HIDDEN_DIM, NUM_LAYERS)

    fwd = jax.jit(functools.partial(gconv_forward, num_graphs=NUM_GRAPHS))
    z, g = fwd(params, x, edge_index, batch)
    jax.block_until_ready((z, g))

    assert z.shape == (N, HIDDEN_DIM * NUM_LAYERS)
    assert g.shape == (NUM_GRAPHS, HIDDEN_DIM * NUM_LAYERS)
    assert bool(jnp.all(jnp.isfinite(z))) and bool(jnp.all(jnp.isfinite(g)))
    print("KERNEL_OK")
</pallas_src>

<mosaic_0001>
module attributes {stable_mosaic.version = 11 : i64} {
  func.func @gin_pass1_kernel(%arg0: i32, %arg1: i32, %arg2: memref<2x1xi32, #tpu.memory_space<smem>>, %arg3: memref<2xi32, #tpu.memory_space<smem>>, %arg4: memref<128x256xbf16, #tpu.memory_space<vmem>>, %arg5: memref<256x128xbf16, #tpu.memory_space<vmem>>, %arg6: memref<128x128xbf16, #tpu.memory_space<vmem>>, %arg7: memref<1x128xf32, #tpu.memory_space<vmem>>, %arg8: memref<128x128xbf16, #tpu.memory_space<vmem>>, %arg9: memref<1x128xf32, #tpu.memory_space<vmem>>, %arg10: memref<128x128xf32, #tpu.memory_space<vmem>>, %arg11: memref<1x2x128xf32, #tpu.memory_space<vmem>>, %arg12: memref<128x128xf32, #tpu.memory_space<vmem>>) attributes {dimension_semantics = [#tpu.dimension_semantics<parallel>, #tpu.dimension_semantics<arbitrary>], iteration_bounds = array<i64: 2, 1>, scalar_prefetch = 2 : i64, scratch_operands = 1 : i64, tpu.core_type = #tpu.core_type<tc>, window_params = [{transform_indices = @transform_0, window_bounds = array<i64: 128, 256>}, {transform_indices = @transform_1, window_bounds = array<i64: 256, 128>}, {pipeline_mode = #tpu.pipeline_mode<synchronous>, transform_indices = @transform_2, window_bounds = array<i64: 128, 128>}, {pipeline_mode = #tpu.pipeline_mode<synchronous>, transform_indices = @transform_3, window_bounds = array<i64: 1, 128>}, {pipeline_mode = #tpu.pipeline_mode<synchronous>, transform_indices = @transform_4, window_bounds = array<i64: 128, 128>}, {pipeline_mode = #tpu.pipeline_mode<synchronous>, transform_indices = @transform_5, window_bounds = array<i64: 1, 128>}, {transform_indices = @transform_6, window_bounds = array<i64: 128, 128>}, {transform_indices = @transform_7, window_bounds = array<i64: 1, 2, 128>}]} {
    %c0_i32 = arith.constant 0 : i32
    %0 = arith.cmpi eq, %arg1, %c0_i32 : i32
    %1 = arith.extui %0 : i1 to i32
    %c0_i32_0 = arith.constant 0 : i32
    %2 = arith.cmpi ne, %1, %c0_i32_0 : i32
    scf.if %2 {
      %cst = arith.constant 0.000000e+00 : f32
      %11 = vector.broadcast %cst : f32 to vector<128x128xf32>
      %c0 = arith.constant 0 : index
      %c0_4 = arith.constant 0 : index
      %12 = vector.load %arg12[%c0, %c0_4] : memref<128x128xf32, #tpu.memory_space<vmem>>, vector<128x128xf32>
      tpu.vector_store %arg12[%c0, %c0_4], %11 {strides = array<i32>} : memref<128x128xf32, #tpu.memory_space<vmem>>, vector<128x128xf32>,
    } else {
    }
    %3 = arith.index_cast %arg0 : i32 to index
    %4 = memref.load %arg3[%3] : memref<2xi32, #tpu.memory_space<smem>>
    %5 = arith.cmpi slt, %arg1, %4 : i32
    %6 = arith.extui %5 : i1 to i32
    %c0_i32_1 = arith.constant 0 : i32
    %7 = arith.cmpi ne, %6, %c0_i32_1 : i32
    scf.if %7 {
      %c0 = arith.constant 0 : index
      %c0_4 = arith.constant 0 : index
      %11 = vector.load %arg12[%c0, %c0_4] : memref<128x128xf32, #tpu.memory_space<vmem>>, vector<128x128xf32>
      %c0_5 = arith.constant 0 : index
      %c0_6 = arith.constant 0 : index
      %12 = vector.load %arg4[%c0_5, %c0_6] : memref<128x256xbf16, #tpu.memory_space<vmem>>, vector<128x256xbf16>
      %c0_7 = arith.constant 0 : index
      %c0_8 = arith.constant 0 : index
      %13 = vector.load %arg5[%c0_7, %c0_8] : memref<256x128xbf16, #tpu.memory_space<vmem>>, vector<256x128xbf16>
      %cst = arith.constant dense<0.000000e+00> : vector<128x128xf32>
      %14 = tpu.matmul %12, %13, %cst {dimension_numbers = #tpu.dot_dimension_numbers<[1], [0], [0], [1], [0, 0, 1, 1], [], []>} : vector<128x256xbf16>, vector<256x128xbf16>, vector<128x128xf32> -> vector<128x128xf32>
      %15 = arith.addf %11, %14 : vector<128x128xf32>
      %c0_9 = arith.constant 0 : index
      %c0_10 = arith.constant 0 : index
      %16 = vector.load %arg12[%c0_9, %c0_10] : memref<128x128xf32, #tpu.memory_space<vmem>>, vector<128x128xf32>
      tpu.vector_store %arg12[%c0_9, %c0_10], %15 {strides = array<i32>} : memref<128x128xf32, #tpu.memory_space<vmem>>, vector<128x128xf32>,
    } else {
    }
    %c0_i32_2 = arith.constant 0 : i32
    %8 = arith.cmpi eq, %arg1, %c0_i32_2 : i32
    %9 = arith.extui %8 : i1 to i32
    %c0_i32_3 = arith.constant 0 : i32
    %10 = arith.cmpi ne, %9, %c0_i32_3 : i32
    scf.if %10 {
      %c0 = arith.constant 0 : index
      %c0_4 = arith.constant 0 : index
      %11 = vector.load %arg12[%c0, %c0_4] : memref<128x128xf32, #tpu.memory_space<vmem>>, vector<128x128xf32>
      %12 = arith.truncf %11 : vector<128x128xf32> to vector<128x128xbf16>
      %c0_5 = arith.constant 0 : index
      %c0_6 = arith.constant 0 : index
      %13 = vector.load %arg6[%c0_5, %c0_6] : memref<128x128xbf16, #tpu.memory_space<vmem>>, vector<128x128xbf16>
      %cst = arith.constant dense<0.000000e+00> : vector<128x128xf32>
      %14 = tpu.matmul %12, %13, %cst {dimension_numbers = #tpu.dot_dimension_numbers<[1], [0], [0], [1], [0, 0, 1, 1], [], []>} : vector<128x128xbf16>, vector<128x128xbf16>, vector<128x128xf32> -> vector<128x128xf32>
      %c0_7 = arith.constant 0 : index
      %c0_8 = arith.constant 0 : index
      %15 = vector.load %arg7[%c0_7, %c0_8] : memref<1x128xf32, #tpu.memory_space<vmem>>, vector<1x128xf32>
      %16 = vector.broadcast %15 : vector<1x128xf32> to vector<128x128xf32>
      %17 = arith.addf %14, %16 : vector<128x128xf32>
      %cst_9 = arith.constant 0.000000e+00 : f32
      %18 = vector.broadcast %cst_9 : f32 to vector<128x128xf32>
      %19 = arith.maximumf %17, %18 : vector<128x128xf32>
      %20 = arith.truncf %19 : vector<128x128xf32> to vector<128x128xbf16>
      %c0_10 = arith.constant 0 : index
      %c0_11 = arith.constant 0 : index
      %21 = vector.load %arg8[%c0_10, %c0_11] : memref<128x128xbf16, #tpu.memory_space<vmem>>, vector<128x128xbf16>
      %cst_12 = arith.constant dense<0.000000e+00> : vector<128x128xf32>
      %22 = tpu.matmul %20, %21, %cst_12 {dimension_numbers = #tpu.dot_dimension_numbers<[1], [0], [0], [1], [0, 0, 1, 1], [], []>} : vector<128x128xbf16>, vector<128x128xbf16>, vector<128x128xf32> -> vector<128x128xf32>
      %c0_13 = arith.constant 0 : index
      %c0_14 = arith.constant 0 : index
      %23 = vector.load %arg9[%c0_13, %c0_14] : memref<1x128xf32, #tpu.memory_space<vmem>>, vector<1x128xf32>
      %24 = vector.broadcast %23 : vector<1x128xf32> to vector<128x128xf32>
      %25 = arith.addf %22, %24 : vector<128x128xf32>
      %cst_15 = arith.constant 0.000000e+00 : f32
      %26 = vector.broadcast %cst_15 : f32 to vector<128x128xf32>
      %27 = arith.maximumf %25, %26 : vector<128x128xf32>
      %c0_16 = arith.constant 0 : index
      %c0_17 = arith.constant 0 : index
      %28 = vector.load %arg10[%c0_16, %c0_17] : memref<128x128xf32, #tpu.memory_space<vmem>>, vector<128x128xf32>
      tpu.vector_store %arg10[%c0_16, %c0_17], %27 {strides = array<i32>} : memref<128x128xf32, #tpu.memory_space<vmem>>, vector<128x128xf32>,
      %c128_i32 = arith.constant 128 : i32
      %29 = arith.muli %arg0, %c128_i32 : i32
      %30 = tpu.iota {dimensions = array<i32: 0>} : vector<128x1xi32>
      %31 = vector.broadcast %29 : i32 to vector<128x1xi32>
      %32 = arith.addi %31, %30 : vector<128x1xi32>
      %c200_i32 = arith.constant 200 : i32
      %33 = vector.broadcast %c200_i32 : i32 to vector<128x1xi32>
      %34 = arith.cmpi slt, %32, %33 : vector<128x1xi32>
      %35 = arith.extui %34 : vector<128x1xi1> to vector<128x1xi32>
      %36 = arith.sitofp %35 : vector<128x1xi32> to vector<128x1xf32>
      %37 = vector.broadcast %36 : vector<128x1xf32> to vector<128x128xf32>
      %38 = arith.mulf %27, %37 : vector<128x128xf32>
      %cst_18 = arith.constant dense<0.000000e+00> : vector<128xf32>
      %39 = vector.multi_reduction <add>, %38, %cst_18 [0] : vector<128x128xf32> to vector<128xf32>
      %40 = vector.shape_cast %39 : vector<128xf32> to vector<1x128xf32>
      %c0_19 = arith.constant 0 : index
      %c0_20 = arith.constant 0 : index
      %c0_21 = arith.constant 0 : index
      %41 = vector.load %arg11[%c0_19, %c0_20, %c0_21] : memref<1x2x128xf32, #tpu.memory_space<vmem>>, vector<1x1x128xf32>
      %42 = vector.shape_cast %41 : vector<1x1x128xf32> to vector<1x128xf32>
      %43 = vector.shape_cast %40 : vector<1x128xf32> to vector<1x1x128xf32>
      tpu.vector_store %arg11[%c0_19, %c0_20, %c0_21], %43 {strides = array<i32>} : memref<1x2x128xf32, #tpu.memory_space<vmem>>, vector<1x1x128xf32>,
      %44 = arith.mulf %38, %38 : vector<128x128xf32>
      %cst_22 = arith.constant dense<0.000000e+00> : vector<128xf32>
      %45 = vector.multi_reduction <add>, %44, %cst_22 [0] : vector<128x128xf32> to vector<128xf32>
      %46 = vector.shape_cast %45 : vector<128xf32> to vector<1x128xf32>
      %c0_23 = arith.constant 0 : index
      %c1 = arith.constant 1 : index
      %c0_24 = arith.constant 0 : index
      %47 = vector.load %arg11[%c0_23, %c1, %c0_24] : memref<1x2x128xf32, #tpu.memory_space<vmem>>, vector<1x1x128xf32>
      %48 = vector.shape_cast %47 : vector<1x1x128xf32> to vector<1x128xf32>
      %49 = vector.shape_cast %46 : vector<1x128xf32> to vector<1x1x128xf32>
      tpu.vector_store %arg11[%c0_23, %c1, %c0_24], %49 {strides = array<i32>} : memref<1x2x128xf32, #tpu.memory_space<vmem>>, vector<1x1x128xf32>,
    } else {
    }
    return
  }
  func.func @transform_0(%arg0: i32, %arg1: i32, %arg2: memref<2x1xi32, #tpu.memory_space<smem>>, %arg3: memref<2xi32, #tpu.memory_space<smem>>) -> (i32, i32) {
    %0 = arith.index_cast %arg0 : i32 to index
    %1 = arith.index_cast %arg1 : i32 to index
    %2 = memref.load %arg2[%0, %1] : memref<2x1xi32, #tpu.memory_space<smem>>
    %c0_i32 = arith.constant 0 : i32
    return %arg0, %2 : i32, i32
  }
  func.func @transform_1(%arg0: i32, %arg1: i32, %arg2: memref<2x1xi32, #tpu.memory_space<smem>>, %arg3: memref<2xi32, #tpu.memory_space<smem>>) -> (i32, i32) {
    %0 = arith.index_cast %arg0 : i32 to index
    %1 = arith.index_cast %arg1 : i32 to index
    %2 = memref.load %arg2[%0, %1] : memref<2x1xi32, #tpu.memory_space<smem>>
    %c0_i32 = arith.constant 0 : i32
    %c0_i32_0 = arith.constant 0 : i32
    return %2, %c0_i32 : i32, i32
  }
  func.func @transform_2(%arg0: i32, %arg1: i32, %arg2: memref<2x1xi32, #tpu.memory_space<smem>>, %arg3: memref<2xi32, #tpu.memory_space<smem>>) -> (i32, i32) {
    %c0_i32 = arith.constant 0 : i32
    %c0_i32_0 = arith.constant 0 : i32
    %c0_i32_1 = arith.constant 0 : i32
    return %c0_i32, %c0_i32_0 : i32, i32
  }
  func.func @transform_3(%arg0: i32, %arg1: i32, %arg2: memref<2x1xi32, #tpu.memory_space<smem>>, %arg3: memref<2xi32, #tpu.memory_space<smem>>) -> (i32, i32) {
    %c0_i32 = arith.constant 0 : i32
    %c0_i32_0 = arith.constant 0 : i32
    %c0_i32_1 = arith.constant 0 : i32
    return %c0_i32, %c0_i32_0 : i32, i32
  }
  func.func @transform_4(%arg0: i32, %arg1: i32, %arg2: memref<2x1xi32, #tpu.memory_space<smem>>, %arg3: memref<2xi32, #tpu.memory_space<smem>>) -> (i32, i32) {
    %c0_i32 = arith.constant 0 : i32
    %c0_i32_0 = arith.constant 0 : i32
    %c0_i32_1 = arith.constant 0 : i32
    return %c0_i32, %c0_i32_0 : i32, i32
  }
  func.func @transform_5(%arg0: i32, %arg1: i32, %arg2: memref<2x1xi32, #tpu.memory_space<smem>>, %arg3: memref<2xi32, #tpu.memory_space<smem>>) -> (i32, i32) {
    %c0_i32 = arith.constant 0 : i32
    %c0_i32_0 = arith.constant 0 : i32
    %c0_i32_1 = arith.constant 0 : i32
    return %c0_i32, %c0_i32_0 : i32, i32
  }
  func.func @transform_6(%arg0: i32, %arg1: i32, %arg2: memref<2x1xi32, #tpu.memory_space<smem>>, %arg3: memref<2xi32, #tpu.memory_space<smem>>) -> (i32, i32) {
    %c0_i32 = arith.constant 0 : i32
    %c0_i32_0 = arith.constant 0 : i32
    return %arg0, %c0_i32 : i32, i32
  }
  func.func @transform_7(%arg0: i32, %arg1: i32, %arg2: memref<2x1xi32, #tpu.memory_space<smem>>, %arg3: memref<2xi32, #tpu.memory_space<smem>>) -> (i32, i32, i32) {
    %c0_i32 = arith.constant 0 : i32
    %c0_i32_0 = arith.constant 0 : i32
    %c0_i32_1 = arith.constant 0 : i32
    return %arg0, %c0_i32, %c0_i32_0 : i32, i32, i32
  }
}

module attributes {stable_mosaic.version = 11 : i64} {
  func.func @bn_apply_pool_kernel(%arg0: i32, %arg1: memref<128x128xf32, #tpu.memory_space<vmem>>, %arg2: memref<1x128xf32, #tpu.memory_space<vmem>>, %arg3: memref<1x128xf32, #tpu.memory_space<vmem>>, %arg4: memref<8x128xf32, #tpu.memory_space<vmem>>, %arg5: memref<256x256xf32, #tpu.memory_space<any>>, %arg6: memref<128x128xf32, #tpu.memory_space<vmem>>, %arg7: memref<128x128xbf16, #tpu.memory_space<vmem>>, %arg8: memref<1x8x128xf32, #tpu.memory_space<vmem>>) attributes {dimension_semantics = [#tpu.dimension_semantics<parallel>], iteration_bounds = array<i64: 2>, scalar_prefetch = 0 : i64, scratch_operands = 0 : i64, tpu.core_type = #tpu.core_type<tc>, window_params = [{transform_indices = @transform_0, window_bounds = array<i64: 128, 128>}, {pipeline_mode = #tpu.pipeline_mode<synchronous>, transform_indices = @transform_1, window_bounds = array<i64: 1, 128>}, {pipeline_mode = #tpu.pipeline_mode<synchronous>, transform_indices = @transform_2, window_bounds = array<i64: 1, 128>}, {transform_indices = @transform_3, window_bounds = array<i64: 8, 128>}, {}, {transform_indices = @transform_5, window_bounds = array<i64: 128, 128>}, {transform_indices = @transform_6, window_bounds = array<i64: 128, 128>}, {transform_indices = @transform_7, window_bounds = array<i64: 1, 8, 128>}]} {
    %c0 = arith.constant 0 : index
    %c0_0 = arith.constant 0 : index
    %0 = vector.load %arg1[%c0, %c0_0] : memref<128x128xf32, #tpu.memory_space<vmem>>, vector<128x128xf32>
    %c0_1 = arith.constant 0 : index
    %c0_2 = arith.constant 0 : index
    %1 = vector.load %arg2[%c0_1, %c0_2] : memref<1x128xf32, #tpu.memory_space<vmem>>, vector<1x128xf32>
    %2 = vector.broadcast %1 : vector<1x128xf32> to vector<128x128xf32>
    %3 = arith.mulf %0, %2 : vector<128x128xf32>
    %c0_3 = arith.constant 0 : index
    %c0_4 = arith.constant 0 : index
    %4 = vector.load %arg3[%c0_3, %c0_4] : memref<1x128xf32, #tpu.memory_space<vmem>>, vector<1x128xf32>
    %5 = vector.broadcast %4 : vector<1x128xf32> to vector<128x128xf32>
    %6 = arith.addf %3, %5 : vector<128x128xf32>
    %c0_5 = arith.constant 0 : index
    %c0_6 = arith.constant 0 : index
    %7 = vector.load %arg6[%c0_5, %c0_6] : memref<128x128xf32, #tpu.memory_space<vmem>>, vector<128x128xf32>
    tpu.vector_store %arg6[%c0_5, %c0_6], %6 {strides = array<i32>} : memref<128x128xf32, #tpu.memory_space<vmem>>, vector<128x128xf32>,
    %8 = arith.truncf %6 : vector<128x128xf32> to vector<128x128xbf16>
    %c0_7 = arith.constant 0 : index
    %c0_8 = arith.constant 0 : index
    %9 = vector.load %arg7[%c0_7, %c0_8] : memref<128x128xbf16, #tpu.memory_space<vmem>>, vector<128x128xbf16>
    tpu.vector_store %arg7[%c0_7, %c0_8], %8 {strides = array<i32>} : memref<128x128xbf16, #tpu.memory_space<vmem>>, vector<128x128xbf16>,
    %c0_9 = arith.constant 0 : index
    %c0_10 = arith.constant 0 : index
    %10 = vector.load %arg4[%c0_9, %c0_10] : memref<8x128xf32, #tpu.memory_space<vmem>>, vector<8x128xf32>
    %cst = arith.constant dense<0.000000e+00> : vector<8x128xf32>
    %11 = tpu.matmul %10, %6, %cst {dimension_numbers = #tpu.dot_dimension_numbers<[1], [0], [0], [1], [0, 0, 1, 1], [], []>} : vector<8x128xf32>, vector<128x128xf32>, vector<8x128xf32> -> vector<8x128xf32>
    %c0_11 = arith.constant 0 : index
    %c0_12 = arith.constant 0 : index
    %c0_13 = arith.constant 0 : index
    %12 = vector.load %arg8[%c0_11, %c0_12, %c0_13] : memref<1x8x128xf32, #tpu.memory_space<vmem>>, vector<1x8x128xf32>
    %13 = vector.shape_cast %12 : vector<1x8x128xf32> to vector<8x128xf32>
    %14 = vector.shape_cast %11 : vector<8x128xf32> to vector<1x8x128xf32>
    tpu.vector_store %arg8[%c0_11, %c0_12, %c0_13], %14 {strides = array<i32>} : memref<1x8x128xf32, #tpu.memory_space<vmem>>, vector<1x8x128xf32>,
    return
  }
  func.func @transform_0(%arg0: i32) -> (i32, i32) {
    %c0_i32 = arith.constant 0 : i32
    %c0_i32_0 = arith.constant 0 : i32
    return %arg0, %c0_i32 : i32, i32
  }
  func.func @transform_1(%arg0: i32) -> (i32, i32) {
    %c0_i32 = arith.constant 0 : i32
    %c0_i32_0 = arith.constant 0 : i32
    %c0_i32_1 = arith.constant 0 : i32
    return %c0_i32, %c0_i32_0 : i32, i32
  }
  func.func @transform_2(%arg0: i32) -> (i32, i32) {
    %c0_i32 = arith.constant 0 : i32
    %c0_i32_0 = arith.constant 0 : i32
    %c0_i32_1 = arith.constant 0 : i32
    return %c0_i32, %c0_i32_0 : i32, i32
  }
  func.func @transform_3(%arg0: i32) -> (i32, i32) {
    %c0_i32 = arith.constant 0 : i32
    %c0_i32_0 = arith.constant 0 : i32
    return %c0_i32, %arg0 : i32, i32
  }
  func.func @transform_5(%arg0: i32) -> (i32, i32) {
    %c0_i32 = arith.constant 0 : i32
    %c0_i32_0 = arith.constant 0 : i32
    return %arg0, %c0_i32 : i32, i32
  }
  func.func @transform_6(%arg0: i32) -> (i32, i32) {
    %c0_i32 = arith.constant 0 : i32
    %c0_i32_0 = arith.constant 0 : i32
    return %arg0, %c0_i32 : i32, i32
  }
  func.func @transform_7(%arg0: i32) -> (i32, i32, i32) {
    %c0_i32 = arith.constant 0 : i32
    %c0_i32_0 = arith.constant 0 : i32
    %c0_i32_1 = arith.constant 0 : i32
    return %arg0, %c0_i32, %c0_i32_0 : i32, i32, i32
  }
}

module attributes {stable_mosaic.version = 11 : i64} {
  func.func @bn_apply_pool_kernel(%arg0: i32, %arg1: memref<128x128xf32, #tpu.memory_space<vmem>>, %arg2: memref<1x128xf32, #tpu.memory_space<vmem>>, %arg3: memref<1x128xf32, #tpu.memory_space<vmem>>, %arg4: memref<8x128xf32, #tpu.memory_space<vmem>>, %arg5: memref<256x256xf32, #tpu.memory_space<any>>, %arg6: memref<128x128xf32, #tpu.memory_space<vmem>>, %arg7: memref<128x128xbf16, #tpu.memory_space<vmem>>, %arg8: memref<1x8x128xf32, #tpu.memory_space<vmem>>) attributes {dimension_semantics = [#tpu.dimension_semantics<parallel>], iteration_bounds = array<i64: 2>, scalar_prefetch = 0 : i64, scratch_operands = 0 : i64, tpu.core_type = #tpu.core_type<tc>, window_params = [{transform_indices = @transform_0, window_bounds = array<i64: 128, 128>}, {pipeline_mode = #tpu.pipeline_mode<synchronous>, transform_indices = @transform_1, window_bounds = array<i64: 1, 128>}, {pipeline_mode = #tpu.pipeline_mode<synchronous>, transform_indices = @transform_2, window_bounds = array<i64: 1, 128>}, {transform_indices = @transform_3, window_bounds = array<i64: 8, 128>}, {}, {transform_indices = @transform_5, window_bounds = array<i64: 128, 128>}, {transform_indices = @transform_6, window_bounds = array<i64: 128, 128>}, {transform_indices = @transform_7, window_bounds = array<i64: 1, 8, 128>}]} {
    %c0 = arith.constant 0 : index
    %c0_0 = arith.constant 0 : index
    %0 = vector.load %arg1[%c0, %c0_0] : memref<128x128xf32, #tpu.memory_space<vmem>>, vector<128x128xf32>
    %c0_1 = arith.constant 0 : index
    %c0_2 = arith.constant 0 : index
    %1 = vector.load %arg2[%c0_1, %c0_2] : memref<1x128xf32, #tpu.memory_space<vmem>>, vector<1x128xf32>
    %2 = vector.broadcast %1 : vector<1x128xf32> to vector<128x128xf32>
    %3 = arith.mulf %0, %2 : vector<128x128xf32>
    %c0_3 = arith.constant 0 : index
    %c0_4 = arith.constant 0 : index
    %4 = vector.load %arg3[%c0_3, %c0_4] : memref<1x128xf32, #tpu.memory_space<vmem>>, vector<1x128xf32>
    %5 = vector.broadcast %4 : vector<1x128xf32> to vector<128x128xf32>
    %6 = arith.addf %3, %5 : vector<128x128xf32>
    %c0_5 = arith.constant 0 : index
    %c0_6 = arith.constant 0 : index
    %7 = vector.load %arg6[%c0_5, %c0_6] : memref<128x128xf32, #tpu.memory_space<vmem>>, vector<128x128xf32>
    tpu.vector_store %arg6[%c0_5, %c0_6], %6 {strides = array<i32>} : memref<128x128xf32, #tpu.memory_space<vmem>>, vector<128x128xf32>,
    %8 = arith.truncf %6 : vector<128x128xf32> to vector<128x128xbf16>
    %c0_7 = arith.constant 0 : index
    %c0_8 = arith.constant 0 : index
    %9 = vector.load %arg7[%c0_7, %c0_8] : memref<128x128xbf16, #tpu.memory_space<vmem>>, vector<128x128xbf16>
    tpu.vector_store %arg7[%c0_7, %c0_8], %8 {strides = array<i32>} : memref<128x128xbf16, #tpu.memory_space<vmem>>, vector<128x128xbf16>,
    %c0_9 = arith.constant 0 : index
    %c0_10 = arith.constant 0 : index
    %10 = vector.load %arg4[%c0_9, %c0_10] : memref<8x128xf32, #tpu.memory_space<vmem>>, vector<8x128xf32>
    %cst = arith.constant dense<0.000000e+00> : vector<8x128xf32>
    %11 = tpu.matmul %10, %6, %cst {dimension_numbers = #tpu.dot_dimension_numbers<[1], [0], [0], [1], [0, 0, 1, 1], [], []>} : vector<8x128xf32>, vector<128x128xf32>, vector<8x128xf32> -> vector<8x128xf32>
    %c0_11 = arith.constant 0 : index
    %c0_12 = arith.constant 0 : index
    %c0_13 = arith.constant 0 : index
    %12 = vector.load %arg8[%c0_11, %c0_12, %c0_13] : memref<1x8x128xf32, #tpu.memory_space<vmem>>, vector<1x8x128xf32>
    %13 = vector.shape_cast %12 : vector<1x8x128xf32> to vector<8x128xf32>
    %14 = vector.shape_cast %11 : vector<8x128xf32> to vector<1x8x128xf32>
    tpu.vector_store %arg8[%c0_11, %c0_12, %c0_13], %14 {strides = array<i32>} : memref<1x8x128xf32, #tpu.memory_space<vmem>>, vector<1x8x128xf32>,
    return
  }
  func.func @transform_0(%arg0: i32) -> (i32, i32) {
    %c0_i32 = arith.constant 0 : i32
    %c0_i32_0 = arith.constant 0 : i32
    return %arg0, %c0_i32 : i32, i32
  }
  func.func @transform_1(%arg0: i32) -> (i32, i32) {
    %c0_i32 = arith.constant 0 : i32
    %c0_i32_0 = arith.constant 0 : i32
    %c0_i32_1 = arith.constant 0 : i32
    return %c0_i32, %c0_i32_0 : i32, i32
  }
  func.func @transform_2(%arg0: i32) -> (i32, i32) {
    %c0_i32 = arith.constant 0 : i32
    %c0_i32_0 = arith.constant 0 : i32
    %c0_i32_1 = arith.constant 0 : i32
    return %c0_i32, %c0_i32_0 : i32, i32
  }
  func.func @transform_3(%arg0: i32) -> (i32, i32) {
    %c0_i32 = arith.constant 0 : i32
    %c0_i32_0 = arith.constant 0 : i32
    return %c0_i32, %arg0 : i32, i32
  }
  func.func @transform_5(%arg0: i32) -> (i32, i32) {
    %c1_i32 = arith.constant 1 : i32
    %c0_i32 = arith.constant 0 : i32
    return %arg0, %c1_i32 : i32, i32
  }
  func.func @transform_6(%arg0: i32) -> (i32, i32) {
    %c0_i32 = arith.constant 0 : i32
    %c0_i32_0 = arith.constant 0 : i32
    return %arg0, %c0_i32 : i32, i32
  }
  func.func @transform_7(%arg0: i32) -> (i32, i32, i32) {
    %c0_i32 = arith.constant 0 : i32
    %c0_i32_0 = arith.constant 0 : i32
    %c0_i32_1 = arith.constant 0 : i32
    return %arg0, %c0_i32, %c0_i32_0 : i32, i32, i32
  }
}

</mosaic_0001>

<llo_original>
// kernel: gconv_forward.5
$region0: #{gconv_forward.5}
  #allocation0 [shape = 'u32[]', space=smem, size = 0x4, offset = 0x4, fixed_abs, tag = 'smem constant byte address 0x4 - core index']
  #allocation1 [shape = 'u32[72,128]{1,0:T(1,128)}', space=vmem, size = 0x9000, scoped, tag = 'internal scratch']
  %s0 = inlined_call_operand.vmem [shape: f32[256,128], index: 0, kind: input, shape index: {}]
  %s1 = inlined_call_operand.vmem [shape: f32[1,128], index: 1, kind: input, shape index: {}]
  %s2 = inlined_call_operand.vmem [shape: f32[1,128], index: 2, kind: input, shape index: {}]
  %s3 = inlined_call_operand.vmem [shape: f32[8,256], index: 3, kind: input, shape index: {}]
  %s4 = inlined_call_operand.vmem [shape: f32[256,256], index: 4, kind: input, shape index: {}, may-alias: {4,5}]
  %s5 = inlined_call_operand.vmem [shape: f32[256,256], index: 5, kind: output, shape index: {0}, may-alias: {4,5}]
  %s6 = inlined_call_operand.vmem [shape: bf16[256,128], index: 6, kind: output, shape index: {1}]
  %s7 = inlined_call_operand.vmem [shape: f32[2,8,128], index: 7, kind: output, shape index: {2}]
  %8 = xla_tuple %s5, %s6, %s7
  %s9 = sld [smem:[#allocation0]]
  $region99: #{gconv_forward.5} parent=0
    _
  %s11 = ssub.s32 1, %s9
  %s12 = scalar_select 0, %s11, %s9
  $region1: #{gconv_forward.5} parent=0
    #allocation2 [shape = 'u8[131072]{0}', space=vmem, size = 0x20000, scoped, tag = 'output window, operand 0']
    loop: start=0, step=1, limit=4
    $region2: #{gconv_forward.5} parent=1 // loop_pre_header
      _
    $region3: #{gconv_forward.5} parent=1 // loop_header
      %s14 = sphi 0, %s18
      %p15 = scmp.ge.s32.totalorder %s14, 4
      %s24 = sphi 0, %s26
      %s27 = sphi 0, %s24
      %s28 = sphi 0, %s27
      %s44 = sphi 0, %s28
      %s48 = sphi 0, %s48
      %s50 = sphi 0, %s48
      %s51 = sphi 0, %s50
      %s65 = sphi 0, %s51
      %s69 = sphi 0, %s69
      %s71 = sphi 0, %s69
      %s72 = sphi 0, %s71
      %s86 = sphi 0, %s72
      %s92 = sphi 0, %s94
      %s95 = sphi 0, %s92
      %s96 = sphi 0, %s95
      %s112 = sphi 0, %s96
      %s118 = sphi 0, %s120
      %s121 = sphi 0, %s118
      %s122 = sphi 0, %s121
      %s138 = sphi 0, %s122
      %s144 = sphi 0, %s146
      %s147 = sphi 0, %s144
      %s148 = sphi 0, %s147
      %s164 = sphi 0, %s148
      %s170 = sphi 0, %s172
      %s173 = sphi 0, %s170
      %s174 = sphi 0, %s173
      %s190 = sphi 0, %s174
    $region4: #{gconv_forward.5} parent=1 // loop_header_branch
      %17 = sbr.rel (%p15) target = $region8
    $region5: #{gconv_forward.5} parent=1 // loop_body
      %s19 = ssub.s32 %s14, 1
      %s20 = ssub.s32 %s14, 2
      %s21 = sadd.s32 %s14, 1
      %s22 = ssub.s32 %s14, %s21
      %p23 = scmp.eq.s32.totalorder %s22, 0
      %s25 = sadd.s32 %s24, 1
      %s26 = scalar_select %p23, %s24, %s25
      %p29 = pneg %p23
      %p30 = scmp.eq.s32.totalorder %s14, 1
      %p31 = por %p29, %p30
      %p32 = scmp.ne.s32.totalorder %s24, %s27
      %p33 = scmp.eq.s32.totalorder %s14, 0
      %p34 = por %p32, %p33
      %p35 = scmp.ne.s32.totalorder %s24, %s27
      %p36 = scmp.eq.s32.totalorder %s19, 1
      %p37 = por %p35, %p36
      %p38 = scmp.ne.s32.totalorder %s27, %s28
      %p39 = scmp.eq.s32.totalorder %s19, 0
      %p40 = por %p38, %p39
      %p41 = scmp.ne.s32.totalorder %s27, %s28
      %p42 = scmp.eq.s32.totalorder %s20, 1
      %p43 = por %p41, %p42
      %p45 = scmp.ne.s32.totalorder %s28, %s44
      %p46 = scmp.eq.s32.totalorder %s20, 0
      %p47 = por %p45, %p46
      %s49 = sadd.s32 %s48, 1
      %p52 = scmp.eq.s32.totalorder %s14, 1
      %p53 = scmp.ne.s32.totalorder %s48, %s50
      %p54 = scmp.eq.s32.totalorder %s14, 0
      %p55 = por %p53, %p54
      %p56 = scmp.ne.s32.totalorder %s48, %s50
      %p57 = scmp.eq.s32.totalorder %s19, 1
      %p58 = por %p56, %p57
      %p59 = scmp.ne.s32.totalorder %s50, %s51
      %p60 = scmp.eq.s32.totalorder %s19, 0
      %p61 = por %p59, %p60
      %p62 = scmp.ne.s32.totalorder %s50, %s51
      %p63 = scmp.eq.s32.totalorder %s20, 1
      %p64 = por %p62, %p63
      %p66 = scmp.ne.s32.totalorder %s51, %s65
      %p67 = scmp.eq.s32.totalorder %s20, 0
      %p68 = por %p66, %p67
      %s70 = sadd.s32 %s69, 1
      %p73 = scmp.eq.s32.totalorder %s14, 1
      %p74 = scmp.ne.s32.totalorder %s69, %s71
      %p75 = scmp.eq.s32.totalorder %s14, 0
      %p76 = por %p74, %p75
      %p77 = scmp.ne.s32.totalorder %s69, %s71
      %p78 = scmp.eq.s32.totalorder %s19, 1
      %p79 = por %p77, %p78
      %p80 = scmp.ne.s32.totalorder %s71, %s72
      %p81 = scmp.eq.s32.totalorder %s19, 0
      %p82 = por %p80, %p81
      %p83 = scmp.ne.s32.totalorder %s71, %s72
      %p84 = scmp.eq.s32.totalorder %s20, 1
      %p85 = por %p83, %p84
      %p87 = scmp.ne.s32.totalorder %s72, %s86
      %p88 = scmp.eq.s32.totalorder %s20, 0
      %p89 = por %p87, %p88
      %s90 = ssub.s32 %s14, %s21
      %p91 = scmp.eq.s32.totalorder %s90, 0
      %s93 = sadd.s32 %s92, 1
      %s94 = scalar_select %p91, %s92, %s93
      %p97 = pneg %p91
      %p98 = scmp.eq.s32.totalorder %s14, 1
      %p99 = por %p97, %p98
      %p100 = scmp.ne.s32.totalorder %s92, %s95
      %p101 = scmp.eq.s32.totalorder %s14, 0
      %p102 = por %p100, %p101
      %p103 = scmp.ne.s32.totalorder %s92, %s95
      %p104 = scmp.eq.s32.totalorder %s19, 1
      %p105 = por %p103, %p104
      %p106 = scmp.ne.s32.totalorder %s95, %s96
      %p107 = scmp.eq.s32.totalorder %s19, 0
      %p108 = por %p106, %p107
      %p109 = scmp.ne.s32.totalorder %s95, %s96
      %p110 = scmp.eq.s32.totalorder %s20, 1
      %p111 = por %p109, %p110
      %p113 = scmp.ne.s32.totalorder %s96, %s112
      %p114 = scmp.eq.s32.totalorder %s20, 0
      %p115 = por %p113, %p114
      %s116 = ssub.s32 %s14, %s21
      %p117 = scmp.eq.s32.totalorder %s116, 0
      %s119 = sadd.s32 %s118, 1
      %s120 = scalar_select %p117, %s118, %s119
      %p123 = pneg %p117
      %p124 = scmp.eq.s32.totalorder %s14, 1
      %p125 = por %p123, %p124
      %p126 = scmp.ne.s32.totalorder %s118, %s121
      %p127 = scmp.eq.s32.totalorder %s14, 0
      %p128 = por %p126, %p127
      %p129 = scmp.ne.s32.totalorder %s118, %s121
      %p130 = scmp.eq.s32.totalorder %s19, 1
      %p131 = por %p129, %p130
      %p132 = scmp.ne.s32.totalorder %s121, %s122
      %p133 = scmp.eq.s32.totalorder %s19, 0
      %p134 = por %p132, %p133
      %p135 = scmp.ne.s32.totalorder %s121, %s122
      %p136 = scmp.eq.s32.totalorder %s20, 1
      %p137 = por %p135, %p136
      %p139 = scmp.ne.s32.totalorder %s122, %s138
      %p140 = scmp.eq.s32.totalorder %s20, 0
      %p141 = por %p139, %p140
      %s142 = ssub.s32 %s14, %s21
      %p143 = scmp.eq.s32.totalorder %s142, 0
      %s145 = sadd.s32 %s144, 1
      %s146 = scalar_select %p143, %s144, %s145
      %p149 = pneg %p143
      %p150 = scmp.eq.s32.totalorder %s14, 1
      %p151 = por %p149, %p150
      %p152 = scmp.ne.s32.totalorder %s144, %s147
      %p153 = scmp.eq.s32.totalorder %s14, 0
      %p154 = por %p152, %p153
      %p155 = scmp.ne.s32.totalorder %s144, %s147
      %p156 = scmp.eq.s32.totalorder %s19, 1
      %p157 = por %p155, %p156
      %p158 = scmp.ne.s32.totalorder %s147, %s148
      %p159 = scmp.eq.s32.totalorder %s19, 0
      %p160 = por %p158, %p159
      %p161 = scmp.ne.s32.totalorder %s147, %s148
      %p162 = scmp.eq.s32.totalorder %s20, 1
      %p163 = por %p161, %p162
      %p165 = scmp.ne.s32.totalorder %s148, %s164
      %p166 = scmp.eq.s32.totalorder %s20, 0
      %p167 = por %p165, %p166
      %s168 = ssub.s32 %s14, %s21
      %p169 = scmp.eq.s32.totalorder %s168, 0
      %s171 = sadd.s32 %s170, 1
      %s172 = scalar_select %p169, %s170, %s171
      %p175 = pneg %p169
      %p176 = scmp.eq.s32.totalorder %s14, 1
      %p177 = por %p175, %p176
      %p178 = scmp.ne.s32.totalorder %s170, %s173
      %p179 = scmp.eq.s32.totalorder %s14, 0
      %p180 = por %p178, %p179
      %p181 = scmp.ne.s32.totalorder %s170, %s173
      %p182 = scmp.eq.s32.totalorder %s19, 1
      %p183 = por %p181, %p182
      %p184 = scmp.ne.s32.totalorder %s173, %s174
      %p185 = scmp.eq.s32.totalorder %s19, 0
      %p186 = por %p184, %p185
      %p187 = scmp.ne.s32.totalorder %s173, %s174
      %p188 = scmp.eq.s32.totalorder %s20, 1
      %p189 = por %p187, %p188
      %p191 = scmp.ne.s32.totalorder %s174, %s190
      %p192 = scmp.eq.s32.totalorder %s20, 0
      %p193 = por %p191, %p192
      %p194 = scmp.le.s32.totalorder 1, %s14
      %p195 = scmp.lt.s32.totalorder %s14, 3
      %p196 = pnand %p194, %p195
      %p197 = pneg %p196
      // Predicated region
      $region9: #{gconv_forward.5} parent=5 // pred_check
        _
      $region10: #{gconv_forward.5} parent=5 // pred_check_branch
        %199 = sbr.rel (%p196) target = $region12
      $region11: #{gconv_forward.5} parent=5 // pred_region
        %s200 = ssub.s32 %s14, 1
        // Predicated region
        $region13: #{gconv_forward.5} parent=11 // pred_check
          %p201 = pneg %p61
        $region14: #{gconv_forward.5} parent=11 // pred_check_branch
          %203 = sbr.rel (%p201) target = $region16
        $region15: #{gconv_forward.5} parent=11 // pred_region
          _
        $region16: #{gconv_forward.5} parent=11 // pred_fallthru
          _
        // Predicated region
        $region17: #{gconv_forward.5} parent=11 // pred_check
          %p204 = pneg %p82
        $region18: #{gconv_forward.5} parent=11 // pred_check_branch
          %206 = sbr.rel (%p204) target = $region20
        $region19: #{gconv_forward.5} parent=11 // pred_region
          _
        $region20: #{gconv_forward.5} parent=11 // pred_fallthru
          _
      $region12: #{gconv_forward.5} parent=5 // pred_fallthru
        _
      %p207 = scmp.lt.s32.totalorder %s14, 2
      // Predicated region
      $region21: #{gconv_forward.5} parent=5 // pred_check
        %p208 = pneg %p207
      $region22: #{gconv_forward.5} parent=5 // pred_check_branch
        %210 = sbr.rel (%p208) target = $region24
      $region23: #{gconv_forward.5} parent=5 // pred_region
        // Predicated region
        $region25: #{gconv_forward.5} parent=23 // pred_check
          %p211 = pneg %p34
        $region26: #{gconv_forward.5} parent=23 // pred_check_branch
          %213 = sbr.rel (%p211) target = $region28
        $region27: #{gconv_forward.5} parent=23 // pred_region
          %s214 = smul.u32 16, %s14
          %p215 = scmp.lt.s32.totalorder %s214, 31
          %s216 = scalar_select %p215, %s214, 31
          %s217 = smul.addr %s216, 8
          %s218 = scalar_lea.vmem %s0, %s217
          %s219 = smul.u32 16, %s14
        $region28: #{gconv_forward.5} parent=23 // pred_fallthru
          _
        // Predicated region
        $region29: #{gconv_forward.5} parent=23 // pred_check
          %p220 = pneg %p102
        $region30: #{gconv_forward.5} parent=23 // pred_check_branch
          %222 = sbr.rel (%p220) target = $region32
        $region31: #{gconv_forward.5} parent=23 // pred_region
          %p223 = scmp.lt.s32.totalorder %s14, 1
          %s224 = scalar_select %p223, %s14, 1
          %s225 = smul.addr %s224, 8
          %s226 = scalar_lea.vmem %s3, %s225
        $region32: #{gconv_forward.5} parent=23 // pred_fallthru
          _
      $region24: #{gconv_forward.5} parent=5 // pred_fallthru
        _
      %p227 = scmp.le.s32.totalorder 1, %s14
      %p228 = scmp.lt.s32.totalorder %s14, 3
      %p229 = pnand %p227, %p228
      %p230 = pneg %p229
      // Predicated region
      $region33: #{gconv_forward.5} parent=5 // pred_check
        _
      $region34: #{gconv_forward.5} parent=5 // pred_check_branch
        %232 = sbr.rel (%p229) target = $region36
      $region35: #{gconv_forward.5} parent=5 // pred_region
        %s233 = ssub.s32 %s14, 1
        %s234 = smul.u32 16, %s19
        %p235 = scmp.lt.s32.totalorder %s234, 31
        %s236 = scalar_select %p235, %s234, 31
        %s237 = smul.addr %s236, 8
        %s238 = scalar_lea.vmem %s0, %s237
        %p239 = pneg %p40
        %p240 = pneg %p37
        %p241 = pneg %p61
        %p242 = pneg %p58
        %p243 = pneg %p82
        %p244 = pneg %p79
        %p245 = scmp.lt.s32.totalorder %s19, 1
        %s246 = scalar_select %p245, %s19, 1
        %s247 = smul.addr %s246, 8
        %s248 = scalar_lea.vmem %s3, %s247
        %p249 = pneg %p108
        %p250 = pneg %p105
        %p251 = pneg %p134
        %p252 = pneg %p131
        %s253 = sand.u32 %s121, 1
        %s254 = sand.u32 %s121, 1
        %s255 = smul.addr %s254, 128
        %s256 = scalar_lea.vmem [#allocation2], %s255
        %p257 = pneg %p160
        %p258 = pneg %p157
        %s259 = smul.u32 16, %s19
        %p260 = scmp.lt.s32.totalorder %s259, 31
        %s261 = scalar_select %p260, %s259, 31
        %s262 = smul.addr %s261, 4
        %s263 = scalar_lea.vmem %s6, %s262
        %p264 = pneg %p186
        %p265 = pneg %p183
        %p266 = scmp.lt.s32.totalorder %s19, 1
        %s267 = scalar_select %p266, %s19, 1
        %s268 = smul.addr %s267, 8
        %s269 = scalar_lea.vmem %s7, %s268
        %s270 = smul.u32 16, %s19
        %p271 = scmp.lt.s32.totalorder %s270, 31
        %s272 = scalar_select %p271, %s270, 31
        %s273 = smul.addr %s272, 8
        %s274 = scalar_lea.vmem %s0, %s273
        %s275 = smul.u32 16, %s19
        %p276 = scmp.lt.s32.totalorder %s19, 1
        %s277 = scalar_select %p276, %s19, 1
        %s278 = smul.addr %s277, 8
        %s279 = scalar_lea.vmem %s3, %s278
        %s280 = smul.u32 16, %s19
        %s281 = smul.u32 16, %s19
        %p282 = scmp.lt.s32.totalorder %s281, 31
        %s283 = scalar_select %p282, %s281, 31
        %s284 = smul.addr %s283, 4
        %s285 = scalar_lea.vmem %s6, %s284
        %s286 = smul.u32 16, %s19
        %p287 = scmp.lt.s32.totalorder %s19, 1
        %s288 = scalar_select %p287, %s19, 1
        %s289 = smul.addr %s288, 8
        %s290 = scalar_lea.vmem %s7, %s289
        %v291 = vld [vmem:[%s274] sm:$0xff]
        %v292 = vld [vmem:[%s274 + $0x8] sm:$0xff]
        %v293 = vld [vmem:[%s274 + $0x10] sm:$0xff]
        %v294 = vld [vmem:[%s274 + $0x18] sm:$0xff]
        %v295 = vld [vmem:[%s274 + $0x20] sm:$0xff]
        %v296 = vld [vmem:[%s274 + $0x28] sm:$0xff]
        %v297 = vld [vmem:[%s274 + $0x30] sm:$0xff]
        %v298 = vld [vmem:[%s274 + $0x38] sm:$0xff]
        %v299 = vld [vmem:[%s274 + $0x40] sm:$0xff]
        %v300 = vld [vmem:[%s274 + $0x48] sm:$0xff]
        %v301 = vld [vmem:[%s274 + $0x50] sm:$0xff]
        %v302 = vld [vmem:[%s274 + $0x58] sm:$0xff]
        %v303 = vld [vmem:[%s274 + $0x60] sm:$0xff]
        %v304 = vld [vmem:[%s274 + $0x68] sm:$0xff]
        %v305 = vld [vmem:[%s274 + $0x70] sm:$0xff]
        %v306 = vld [vmem:[%s274 + $0x78] sm:$0xff]
        %v307 = vld [vmem:[%s1] sm:$0x1]
        %v309 = vperm.slane %v307, 0
        %v311 = vmul.f32 %v291, %v309
        %v312 = vmul.f32 %v292, %v309
        %v313 = vmul.f32 %v293, %v309
        %v314 = vmul.f32 %v294, %v309
        %v315 = vmul.f32 %v295, %v309
        %v316 = vmul.f32 %v296, %v309
        %v317 = vmul.f32 %v297, %v309
        %v318 = vmul.f32 %v298, %v309
        %v319 = vmul.f32 %v299, %v309
        %v320 = vmul.f32 %v300, %v309
        %v321 = vmul.f32 %v301, %v309
        %v322 = vmul.f32 %v302, %v309
        %v323 = vmul.f32 %v303, %v309
        %v324 = vmul.f32 %v304, %v309
        %v325 = vmul.f32 %v305, %v309
        %v326 = vmul.f32 %v306, %v309
        %v327 = vld [vmem:[%s2] sm:$0x1]
        %v329 = vperm.slane %v327, 0
        %v331 = vadd.f32 %v311, %v329
        %v332 = vadd.f32 %v312, %v329
        %v333 = vadd.f32 %v313, %v329
        %v334 = vadd.f32 %v314, %v329
        %v335 = vadd.f32 %v315, %v329
        %v336 = vadd.f32 %v316, %v329
        %v337 = vadd.f32 %v317, %v329
        %v338 = vadd.f32 %v318, %v329
        %v339 = vadd.f32 %v319, %v329
        %v340 = vadd.f32 %v320, %v329
        %v341 = vadd.f32 %v321, %v329
        %v342 = vadd.f32 %v322, %v329
        %v343 = vadd.f32 %v323, %v329
        %v344 = vadd.f32 %v324, %v329
        %v345 = vadd.f32 %v325, %v329
        %v346 = vadd.f32 %v326, %v329
        %347 = vst [vmem:[%s256] sm:$0xff] %v331
        %348 = vst [vmem:[%s256 + $0x8] sm:$0xff] %v332
        %349 = vst [vmem:[%s256 + $0x10] sm:$0xff] %v333
        %350 = vst [vmem:[%s256 + $0x18] sm:$0xff] %v334
        %351 = vst [vmem:[%s256 + $0x20] sm:$0xff] %v335
        %352 = vst [vmem:[%s256 + $0x28] sm:$0xff] %v336
        %353 = vst [vmem:[%s256 + $0x30] sm:$0xff] %v337
        %354 = vst [vmem:[%s256 + $0x38] sm:$0xff] %v338
        %355 = vst [vmem:[%s256 + $0x40] sm:$0xff] %v339
        %356 = vst [vmem:[%s256 + $0x48] sm:$0xff] %v340
        %357 = vst [vmem:[%s256 + $0x50] sm:$0xff] %v341
        %358 = vst [vmem:[%s256 + $0x58] sm:$0xff] %v342
        %359 = vst [vmem:[%s256 + $0x60] sm:$0xff] %v343
        %360 = vst [vmem:[%s256 + $0x68] sm:$0xff] %v344
        %361 = vst [vmem:[%s256 + $0x70] sm:$0xff] %v345
        %362 = vst [vmem:[%s256 + $0x78] sm:$0xff] %v346
        %v363 = vpack.c.bf16 %v331, %v331
        %v364 = vpack.c.bf16 %v332, %v332
        %v365 = vpack.c.bf16 %v333, %v333
        %v366 = vpack.c.bf16 %v334, %v334
        %v367 = vpack.c.bf16 %v335, %v335
        %v368 = vpack.c.bf16 %v336, %v336
        %v369 = vpack.c.bf16 %v337, %v337
        %v370 = vpack.c.bf16 %v338, %v338
        %v371 = vpack.c.bf16 %v339, %v339
        %v372 = vpack.c.bf16 %v340, %v340
        %v373 = vpack.c.bf16 %v341, %v341
        %v374 = vpack.c.bf16 %v342, %v342
        %v375 = vpack.c.bf16 %v343, %v343
        %v376 = vpack.c.bf16 %v344, %v344
        %v377 = vpack.c.bf16 %v345, %v345
        %v378 = vpack.c.bf16 %v346, %v346
        %379 = vst [vmem:[%s285] sm:$0xf] %v363
        %380 = vst [vmem:[%s285 + $0x4] sm:$0xf] %v364
        %381 = vst [vmem:[%s285 + $0x8] sm:$0xf] %v365
        %382 = vst [vmem:[%s285 + $0xc] sm:$0xf] %v366
        %383 = vst [vmem:[%s285 + $0x10] sm:$0xf] %v367
        %384 = vst [vmem:[%s285 + $0x14] sm:$0xf] %v368
        %385 = vst [vmem:[%s285 + $0x18] sm:$0xf] %v369
        %386 = vst [vmem:[%s285 + $0x1c] sm:$0xf] %v370
        %387 = vst [vmem:[%s285 + $0x20] sm:$0xf] %v371
        %388 = vst [vmem:[%s285 + $0x24] sm:$0xf] %v372
        %389 = vst [vmem:[%s285 + $0x28] sm:$0xf] %v373
        %390 = vst [vmem:[%s285 + $0x2c] sm:$0xf] %v374
        %391 = vst [vmem:[%s285 + $0x30] sm:$0xf] %v375
        %392 = vst [vmem:[%s285 + $0x34] sm:$0xf] %v376
        %393 = vst [vmem:[%s285 + $0x38] sm:$0xf] %v377
        %394 = vst [vmem:[%s285 + $0x3c] sm:$0xf] %v378
        %v395 = vld [vmem:[%s279] sm:$0xff]
        %396 = vmatpush.msra.mxu0 %v346
        %397 = vmatpush.msra.mxu0 %v345
        %398 = vmatpush.msra.mxu0 %v344
        %399 = vmatpush.msra.mxu0 %v343
        %400 = vmatpush.msra.mxu0 %v342
        %401 = vmatpush.msra.mxu0 %v341
        %402 = vmatpush.msra.mxu0 %v340
        %403 = vmatpush.msra.mxu0 %v339
        %404 = vmatpush.msra.mxu0 %v338
        %405 = vmatpush.msra.mxu0 %v337
        %406 = vmatpush.msra.mxu0 %v336
        %407 = vmatpush.msra.mxu0 %v335
        %408 = vmatpush.msra.mxu0 %v334
        %409 = vmatpush.msra.mxu0 %v333
        %410 = vmatpush.msra.mxu0 %v332
        %411 = vmatpush.msra.mxu0 %v331
        %412 = vmatmul.f32.gmra.mxu0 %v395
        %v413 = vpop.f32.mrf.mxu0
        %v414 = vadd.f32 0.0, %v413
        %415 = vdwg.mxu0
        %416 = vst [vmem:[%s290] sm:$0xff] %v414
        %s417 = sand.u32 %s121, 1
        %s418 = sand.u32 %s121, 1
        %s419 = smul.addr %s418, 128
        %s420 = scalar_lea.vmem [#allocation2], %s419
        %s421 = smul.u32 16, %s19
        %p422 = scmp.lt.s32.totalorder %s421, 31
        %s423 = scalar_select %p422, %s421, 31
        %s424 = smul.addr %s423, 4
        %s425 = scalar_lea.vmem %s6, %s424
        %p426 = scmp.lt.s32.totalorder %s19, 1
        %s427 = scalar_select %p426, %s19, 1
        %s428 = smul.addr %s427, 8
        %s429 = scalar_lea.vmem %s7, %s428
        // Predicated region
        $region37: #{gconv_forward.5} parent=35 // pred_check
          %p430 = pneg %p131
        $region38: #{gconv_forward.5} parent=35 // pred_check_branch
          %432 = sbr.rel (%p430) target = $region40
        $region39: #{gconv_forward.5} parent=35 // pred_region
          %s433 = smul.u32 16, %s19
          %s434 = smul.addr %s433, 2
          %s435 = smul.addr %s434, 8
          %s436 = scalar_lea.vmem %s5, %s435
          // Predicated region
          $region41: #{gconv_forward.5} parent=39 // pred_check
            _
          $region42: #{gconv_forward.5} parent=39 // pred_check_branch
            %438 = sbr.rel (0) target = $region44
          $region43: #{gconv_forward.5} parent=39 // pred_region
            // Predicated region
            $region45: #{gconv_forward.5} parent=43 // pred_check
              _
            $region46: #{gconv_forward.5} parent=43 // pred_check_branch
              %440 = sbr.rel (0) target = $region48
            $region47: #{gconv_forward.5} parent=43 // pred_region
              // Predicated region
              $region60: #{gconv_forward.5} parent=47 // pred_check
                _
              $region61: #{gconv_forward.5} parent=47 // pred_check_branch
                %486 = sbr.rel (0) target = $region63
              $region62: #{gconv_forward.5} parent=47 // pred_region
                loop: start=0, step=1, limit=1
                $region64: #{gconv_forward.5} parent=62 // loop_pre_header
                  _
                $region65: #{gconv_forward.5} parent=62 // loop_header
                  %s488 = sphi 0, %s492
                  %p489 = scmp.ge.s32.totalorder %s488, 1
                  %s493 = sphi %s420, %s420
                  %s494 = sphi %s436, %s436
                $region66: #{gconv_forward.5} parent=62 // loop_header_branch
                  %491 = sbr.rel (%p489) target = $region70
                $region67: #{gconv_forward.5} parent=62 // loop_body
                  %v495 = vld [vmem:[%s493] sm:$0xff]
                  %496 = vst [vmem:[%s494] sm:$0xff] %v495
                  %v497 = vld [vmem:[%s493 + $0x8] sm:$0xff]
                  %498 = vst [vmem:[%s494 + $0x10] sm:$0xff] %v497
                  %v499 = vld [vmem:[%s493 + $0x10] sm:$0xff]
                  %500 = vst [vmem:[%s494 + $0x20] sm:$0xff] %v499
                  %v501 = vld [vmem:[%s493 + $0x18] sm:$0xff]
                  %502 = vst [vmem:[%s494 + $0x30] sm:$0xff] %v501
                  %v503 = vld [vmem:[%s493 + $0x20] sm:$0xff]
                  %504 = vst [vmem:[%s494 + $0x40] sm:$0xff] %v503
                  %v505 = vld [vmem:[%s493 + $0x28] sm:$0xff]
                  %506 = vst [vmem:[%s494 + $0x50] sm:$0xff] %v505
                  %v507 = vld [vmem:[%s493 + $0x30] sm:$0xff]
                  %508 = vst [vmem:[%s494 + $0x60] sm:$0xff] %v507
                  %v509 = vld [vmem:[%s493 + $0x38] sm:$0xff]
                  %510 = vst [vmem:[%s494 + $0x70] sm:$0xff] %v509
                  %v511 = vld [vmem:[%s493 + $0x40] sm:$0xff]
                  %512 = vst [vmem:[%s494 + $0x80] sm:$0xff] %v511
                  %v513 = vld [vmem:[%s493 + $0x48] sm:$0xff]
                  %514 = vst [vmem:[%s494 + $0x90] sm:$0xff] %v513
                  %v515 = vld [vmem:[%s493 + $0x50] sm:$0xff]
                  %516 = vst [vmem:[%s494 + $0xa0] sm:$0xff] %v515
                  %v517 = vld [vmem:[%s493 + $0x58] sm:$0xff]
                  %518 = vst [vmem:[%s494 + $0xb0] sm:$0xff] %v517
                  %v519 = vld [vmem:[%s493 + $0x60] sm:$0xff]
                  %520 = vst [vmem:[%s494 + $0xc0] sm:$0xff] %v519
                  %v521 = vld [vmem:[%s493 + $0x68] sm:$0xff]
                  %522 = vst [vmem:[%s494 + $0xd0] sm:$0xff] %v521
                  %v523 = vld [vmem:[%s493 + $0x70] sm:$0xff]
                  %524 = vst [vmem:[%s494 + $0xe0] sm:$0xff] %v523
                  %v525 = vld [vmem:[%s493 + $0x78] sm:$0xff]
                  %526 = vst [vmem:[%s494 + $0xf0] sm:$0xff] %v525
                $region68: #{gconv_forward.5} parent=62 // loop_footer
                  %s492 = sadd.s32 1, %s488
                $region69: #{gconv_forward.5} parent=62 // loop_footer_branch
                  %487 = sbr.rel target = $region65
                $region70: #{gconv_forward.5} parent=62 // loop_exit
                  _
              $region63: #{gconv_forward.5} parent=47 // pred_fallthru
                _
              // Predicated region
              $region71: #{gconv_forward.5} parent=47 // pred_check
                _
              $region72: #{gconv_forward.5} parent=47 // pred_check_branch
                %528 = sbr.rel target = $region74
              $region73: #{gconv_forward.5} parent=47 // pred_region
                _
              $region74: #{gconv_forward.5} parent=47 // pred_fallthru
                _
            $region48: #{gconv_forward.5} parent=43 // pred_fallthru
              _
            // Predicated region
            $region49: #{gconv_forward.5} parent=43 // pred_check
              _
            $region50: #{gconv_forward.5} parent=43 // pred_check_branch
              %442 = sbr.rel target = $region52
            $region51: #{gconv_forward.5} parent=43 // pred_region
              %s444 = ssub.s32 256, 1
              loop: start=0, step=1, limit=1
              $region53: #{gconv_forward.5} parent=51 // loop_pre_header
                _
              $region54: #{gconv_forward.5} parent=51 // loop_header
                %s446 = sphi 0, %s450
                %p447 = scmp.ge.s32.totalorder %s446, 1
                %s451 = sphi %s420, %s420
                %s452 = sphi %s436, %s436
              $region55: #{gconv_forward.5} parent=51 // loop_header_branch
                %449 = sbr.rel (%p447) target = $region59
              $region56: #{gconv_forward.5} parent=51 // loop_body
                %v453 = vld [vmem:[%s451] sm:%s444]
                %454 = vst [vmem:[%s452] sm:%s444] %v453
                %v455 = vld [vmem:[%s451 + $0x8] sm:%s444]
                %456 = vst [vmem:[%s452 + $0x10] sm:%s444] %v455
                %v457 = vld [vmem:[%s451 + $0x10] sm:%s444]
                %458 = vst [vmem:[%s452 + $0x20] sm:%s444] %v457
                %v459 = vld [vmem:[%s451 + $0x18] sm:%s444]
                %460 = vst [vmem:[%s452 + $0x30] sm:%s444] %v459
                %v461 = vld [vmem:[%s451 + $0x20] sm:%s444]
                %462 = vst [vmem:[%s452 + $0x40] sm:%s444] %v461
                %v463 = vld [vmem:[%s451 + $0x28] sm:%s444]
                %464 = vst [vmem:[%s452 + $0x50] sm:%s444] %v463
                %v465 = vld [vmem:[%s451 + $0x30] sm:%s444]
                %466 = vst [vmem:[%s452 + $0x60] sm:%s444] %v465
                %v467 = vld [vmem:[%s451 + $0x38] sm:%s444]
                %468 = vst [vmem:[%s452 + $0x70] sm:%s444] %v467
                %v469 = vld [vmem:[%s451 + $0x40] sm:%s444]
                %470 = vst [vmem:[%s452 + $0x80] sm:%s444] %v469
                %v471 = vld [vmem:[%s451 + $0x48] sm:%s444]
                %472 = vst [vmem:[%s452 + $0x90] sm:%s444] %v471
                %v473 = vld [vmem:[%s451 + $0x50] sm:%s444]
                %474 = vst [vmem:[%s452 + $0xa0] sm:%s444] %v473
                %v475 = vld [vmem:[%s451 + $0x58] sm:%s444]
                %476 = vst [vmem:[%s452 + $0xb0] sm:%s444] %v475
                %v477 = vld [vmem:[%s451 + $0x60] sm:%s444]
                %478 = vst [vmem:[%s452 + $0xc0] sm:%s444] %v477
                %v479 = vld [vmem:[%s451 + $0x68] sm:%s444]
                %480 = vst [vmem:[%s452 + $0xd0] sm:%s444] %v479
                %v481 = vld [vmem:[%s451 + $0x70] sm:%s444]
                %482 = vst [vmem:[%s452 + $0xe0] sm:%s444] %v481
                %v483 = vld [vmem:[%s451 + $0x78] sm:%s444]
                %484 = vst [vmem:[%s452 + $0xf0] sm:%s444] %v483
              $region57: #{gconv_forward.5} parent=51 // loop_footer
                %s450 = sadd.s32 1, %s446
              $region58: #{gconv_forward.5} parent=51 // loop_footer_branch
                %445 = sbr.rel target = $region54
              $region59: #{gconv_forward.5} parent=51 // loop_exit
                _
            $region52: #{gconv_forward.5} parent=43 // pred_fallthru
              _
          $region44: #{gconv_forward.5} parent=39 // pred_fallthru
            _
          %529 = vnop
        $region40: #{gconv_forward.5} parent=35 // pred_fallthru
          _
        // Predicated region
        $region75: #{gconv_forward.5} parent=35 // pred_check
          %p530 = pneg %p157
        $region76: #{gconv_forward.5} parent=35 // pred_check_branch
          %532 = sbr.rel (%p530) target = $region78
        $region77: #{gconv_forward.5} parent=35 // pred_region
          %s533 = smul.u32 16, %s19
        $region78: #{gconv_forward.5} parent=35 // pred_fallthru
          _
        // Predicated region
        $region79: #{gconv_forward.5} parent=35 // pred_check
          %p534 = pneg %p183
        $region80: #{gconv_forward.5} parent=35 // pred_check_branch
          %536 = sbr.rel (%p534) target = $region82
        $region81: #{gconv_forward.5} parent=35 // pred_region
          _
        $region82: #{gconv_forward.5} parent=35 // pred_fallthru
          _
      $region36: #{gconv_forward.5} parent=5 // pred_fallthru
        _
      %p537 = scmp.le.s32.totalorder 2, %s14
      // Predicated region
      $region83: #{gconv_forward.5} parent=5 // pred_check
        %p538 = pneg %p537
      $region84: #{gconv_forward.5} parent=5 // pred_check_branch
        %540 = sbr.rel (%p538) target = $region86
      $region85: #{gconv_forward.5} parent=5 // pred_region
        %s541 = ssub.s32 %s14, 2
        // Predicated region
        $region87: #{gconv_forward.5} parent=85 // pred_check
          %p542 = pneg %p137
        $region88: #{gconv_forward.5} parent=85 // pred_check_branch
          %544 = sbr.rel (%p542) target = $region90
        $region89: #{gconv_forward.5} parent=85 // pred_region
          %s545 = sand.u32 %s122, 1
          %s546 = sand.u32 %s122, 1
          %s547 = smul.addr %s546, 128
          %s548 = scalar_lea.vmem [#allocation2], %s547
        $region90: #{gconv_forward.5} parent=85 // pred_fallthru
          _
        // Predicated region
        $region91: #{gconv_forward.5} parent=85 // pred_check
          %p549 = pneg %p163
        $region92: #{gconv_forward.5} parent=85 // pred_check_branch
          %551 = sbr.rel (%p549) target = $region94
        $region93: #{gconv_forward.5} parent=85 // pred_region
          %s552 = smul.u32 16, %s20
          %p553 = scmp.lt.s32.totalorder %s552, 31
          %s554 = scalar_select %p553, %s552, 31
          %s555 = smul.addr %s554, 4
          %s556 = scalar_lea.vmem %s6, %s555
        $region94: #{gconv_forward.5} parent=85 // pred_fallthru
          _
        // Predicated region
        $region95: #{gconv_forward.5} parent=85 // pred_check
          %p557 = pneg %p189
        $region96: #{gconv_forward.5} parent=85 // pred_check_branch
          %559 = sbr.rel (%p557) target = $region98
        $region97: #{gconv_forward.5} parent=85 // pred_region
          %p560 = scmp.lt.s32.totalorder %s20, 1
          %s561 = scalar_select %p560, %s20, 1
          %s562 = smul.addr %s561, 8
          %s563 = scalar_lea.vmem %s7, %s562
        $region98: #{gconv_forward.5} parent=85 // pred_fallthru
          _
      $region86: #{gconv_forward.5} parent=5 // pred_fallthru
        _
    $region6: #{gconv_forward.5} parent=1 // loop_footer
      %s18 = sadd.s32 1, %s14
    $region7: #{gconv_forward.5} parent=1 // loop_footer_branch
      %13 = sbr.rel target = $region3
    $region8: #{gconv_forward.5} parent=1 // loop_exit
      _

// kernel: gconv_forward.4
$region0: #{gconv_forward.4}
  #allocation0 [shape = 'u32[]', space=smem, size = 0x4, offset = 0x4, fixed_abs, tag = 'smem constant byte address 0x4 - core index']
  #allocation1 [shape = 'u32[72,128]{1,0:T(1,128)}', space=vmem, size = 0x9000, scoped, tag = 'internal scratch']
  #allocation2 [shape = 'f32[128,128]{1,0:T(8,128)}', space=vmem, size = 0x10000, scoped, tag = 'scratch operand']
  #allocation3 [shape = 's32[1]{0}', space=sflag, size = 0x4, scoped, tag = 'scoped memory for gconv_forward.4']
  #allocation4 [shape = 'u8[1024]{0}', space=smem, size = 0x400, scoped, tag = 'prefetched SMEM operand 0']
  #allocation5 [shape = 'u8[512]{0}', space=smem, size = 0x200, scoped, tag = 'prefetched SMEM operand 1']
  %s0 = inlined_call_operand.vmem [shape: s32[2,1], index: 0, kind: input, shape index: {}]
  %s1 = inlined_call_operand.vmem [shape: s32[2], index: 1, kind: input, shape index: {}]
  %s2 = inlined_call_operand.vmem [shape: bf16[256,256], index: 2, kind: input, shape index: {}]
  %s3 = inlined_call_operand.vmem [shape: bf16[256,128], index: 3, kind: input, shape index: {}]
  %s4 = inlined_call_operand.vmem [shape: bf16[128,128], index: 4, kind: input, shape index: {}]
  %s5 = inlined_call_operand.vmem [shape: f32[1,128], index: 5, kind: input, shape index: {}]
  %s6 = inlined_call_operand.vmem [shape: bf16[128,128], index: 6, kind: input, shape index: {}]
  %s7 = inlined_call_operand.vmem [shape: f32[1,128], index: 7, kind: input, shape index: {}]
  %s8 = inlined_call_operand.vmem [shape: f32[256,128], index: 8, kind: output, shape index: {0}]
  %s9 = inlined_call_operand.vmem [shape: f32[2,2,128], index: 9, kind: output, shape index: {1}]
  %10 = xla_tuple %s8, %s9
  %s11 = sld [smem:[#allocation0]]
  $region77: #{gconv_forward.4} parent=0
    _
  %s13 = ssub.s32 1, %s11
  %s14 = scalar_select 0, %s13, %s11
  %s16 = sshll.u32 %s0, 4
  %s17 = int_to_ptr.vmem [resolvable:$true] %s16
  %19 = dma.vmem_to_smem %s17, 32, [#allocation4], [#allocation3]
  %s21 = sshll.u32 %s1, 4
  %s22 = int_to_ptr.vmem [resolvable:$true] %s21
  %24 = dma.vmem_to_smem %s22, 16, [#allocation5], [#allocation3]
  %26 = dma.done [#allocation3], 48
  %27 = sfence
  loop: start=0, step=1, limit=4
  $region2: #{gconv_forward.4} parent=0 // loop_pre_header
    _
  $region3: #{gconv_forward.4} parent=0 // loop_header
    %s29 = sphi 0, %s33
    %p30 = scmp.ge.s32.totalorder %s29, 4
    %s36 = sphi 0, %s48
    %s37 = sphi 0, %s44
    %s38 = sphi 0, %s36
    %s39 = sphi 0, %s37
    %s40 = sphi 0, %s38
    %s41 = sphi 0, %s39
    %s69 = sphi 0, %s71
    %s72 = sphi 0, %s69
    %s73 = sphi 0, %s72
    %s89 = sphi 0, %s73
    %s111 = sphi 0, %s113
    %s114 = sphi 0, %s111
    %s115 = sphi 0, %s114
    %s131 = sphi 0, %s115
    %s135 = sphi 0, %s135
    %s137 = sphi 0, %s135
    %s138 = sphi 0, %s137
    %s152 = sphi 0, %s138
    %s156 = sphi 0, %s156
    %s158 = sphi 0, %s156
    %s159 = sphi 0, %s158
    %s173 = sphi 0, %s159
    %s177 = sphi 0, %s177
    %s179 = sphi 0, %s177
    %s180 = sphi 0, %s179
    %s194 = sphi 0, %s180
    %s198 = sphi 0, %s198
    %s200 = sphi 0, %s198
    %s201 = sphi 0, %s200
    %s215 = sphi 0, %s201
    %s221 = sphi 0, %s223
    %s224 = sphi 0, %s221
    %s225 = sphi 0, %s224
    %s241 = sphi 0, %s225
    %s247 = sphi 0, %s249
    %s250 = sphi 0, %s247
    %s251 = sphi 0, %s250
    %s267 = sphi 0, %s251
  $region4: #{gconv_forward.4} parent=0 // loop_header_branch
    %32 = sbr.rel (%p30) target = $region8
  $region5: #{gconv_forward.4} parent=0 // loop_body
    %s34 = ssub.s32 %s29, 1
    %s35 = ssub.s32 %s29, 2
    %s42 = sadd.s32 1, %s37
    %p43 = scmp.ge.s32.totalorder %s42, 1
    %s44 = scalar_select %p43, 0, %s42
    %s45 = sadd.s32 1, %s36
    %s46 = scalar_select %p43, %s45, %s36
    %p47 = scmp.ge.s32.totalorder %s46, 2
    %s48 = scalar_select %p47, 0, %s46
    %s49 = sshra.s32 %s37, 7
    %s50 = sand.u32 %s37, 127
    %s51 = sadd.s32 %s49, %s36
    %s52 = smul.u32 %s51, 128
    %s53 = sshra.s32 %s37, 7
    %s54 = sand.u32 %s37, 127
    %s55 = sadd.s32 %s52, %s54
    %s56 = sld [smem:[#allocation4 + %s55]]
    %s57 = sshra.s32 %s44, 7
    %s58 = sand.u32 %s44, 127
    %s59 = sadd.s32 %s57, %s48
    %s60 = smul.u32 %s59, 128
    %s61 = sshra.s32 %s44, 7
    %s62 = sand.u32 %s44, 127
    %s63 = sadd.s32 %s60, %s62
    %s64 = sld [smem:[#allocation4 + %s63]]
    %s65 = ssub.s32 %s36, %s48
    %s66 = ssub.s32 %s56, %s64
    %s67 = sor.u32 %s65, %s66
    %p68 = scmp.eq.s32.totalorder %s67, 0
    %s70 = sadd.s32 %s69, 1
    %s71 = scalar_select %p68, %s69, %s70
    %p74 = pneg %p68
    %p75 = scmp.eq.s32.totalorder %s29, 1
    %p76 = por %p74, %p75
    %p77 = scmp.ne.s32.totalorder %s69, %s72
    %p78 = scmp.eq.s32.totalorder %s29, 0
    %p79 = por %p77, %p78
    %p80 = scmp.ne.s32.totalorder %s69, %s72
    %p81 = scmp.eq.s32.totalorder %s34, 1
    %p82 = por %p80, %p81
    %p83 = scmp.ne.s32.totalorder %s72, %s73
    %p84 = scmp.eq.s32.totalorder %s34, 0
    %p85 = por %p83, %p84
    %p86 = scmp.ne.s32.totalorder %s72, %s73
    %p87 = scmp.eq.s32.totalorder %s35, 1
    %p88 = por %p86, %p87
    %p90 = scmp.ne.s32.totalorder %s73, %s89
    %p91 = scmp.eq.s32.totalorder %s35, 0
    %p92 = por %p90, %p91
    %s93 = sshra.s32 %s37, 7
    %s94 = sand.u32 %s37, 127
    %s95 = sadd.s32 %s93, %s36
    %s96 = smul.u32 %s95, 128
    %s97 = sshra.s32 %s37, 7
    %s98 = sand.u32 %s37, 127
    %s99 = sadd.s32 %s96, %s98
    %s100 = sld [smem:[#allocation4 + %s99]]
    %s101 = sshra.s32 %s44, 7
    %s102 = sand.u32 %s44, 127
    %s103 = sadd.s32 %s101, %s48
    %s104 = smul.u32 %s103, 128
    %s105 = sshra.s32 %s44, 7
    %s106 = sand.u32 %s44, 127
    %s107 = sadd.s32 %s104, %s106
    %s108 = sld [smem:[#allocation4 + %s107]]
    %s109 = ssub.s32 %s100, %s108
    %p110 = scmp.eq.s32.totalorder %s109, 0
    %s112 = sadd.s32 %s111, 1
    %s113 = scalar_select %p110, %s111, %s112
    %p116 = pneg %p110
    %p117 = scmp.eq.s32.totalorder %s29, 1
    %p118 = por %p116, %p117
    %p119 = scmp.ne.s32.totalorder %s111, %s114
    %p120 = scmp.eq.s32.totalorder %s29, 0
    %p121 = por %p119, %p120
    %p122 = scmp.ne.s32.totalorder %s111, %s114
    %p123 = scmp.eq.s32.totalorder %s34, 1
    %p124 = por %p122, %p123
    %p125 = scmp.ne.s32.totalorder %s114, %s115
    %p126 = scmp.eq.s32.totalorder %s34, 0
    %p127 = por %p125, %p126
    %p128 = scmp.ne.s32.totalorder %s114, %s115
    %p129 = scmp.eq.s32.totalorder %s35, 1
    %p130 = por %p128, %p129
    %p132 = scmp.ne.s32.totalorder %s115, %s131
    %p133 = scmp.eq.s32.totalorder %s35, 0
    %p134 = por %p132, %p133
    %s136 = sadd.s32 %s135, 1
    %p139 = scmp.eq.s32.totalorder %s29, 1
    %p140 = scmp.ne.s32.totalorder %s135, %s137
    %p141 = scmp.eq.s32.totalorder %s29, 0
    %p142 = por %p140, %p141
    %p143 = scmp.ne.s32.totalorder %s135, %s137
    %p144 = scmp.eq.s32.totalorder %s34, 1
    %p145 = por %p143, %p144
    %p146 = scmp.ne.s32.totalorder %s137, %s138
    %p147 = scmp.eq.s32.totalorder %s34, 0
    %p148 = por %p146, %p147
    %p149 = scmp.ne.s32.totalorder %s137, %s138
    %p150 = scmp.eq.s32.totalorder %s35, 1
    %p151 = por %p149, %p150
    %p153 = scmp.ne.s32.totalorder %s138, %s152
    %p154 = scmp.eq.s32.totalorder %s35, 0
    %p155 = por %p153, %p154
    %s157 = sadd.s32 %s156, 1
    %p160 = scmp.eq.s32.totalorder %s29, 1
    %p161 = scmp.ne.s32.totalorder %s156, %s158
    %p162 = scmp.eq.s32.totalorder %s29, 0
    %p163 = por %p161, %p162
    %p164 = scmp.ne.s32.totalorder %s156, %s158
    %p165 = scmp.eq.s32.totalorder %s34, 1
    %p166 = por %p164, %p165
    %p167 = scmp.ne.s32.totalorder %s158, %s159
    %p168 = scmp.eq.s32.totalorder %s34, 0
    %p169 = por %p167, %p168
    %p170 = scmp.ne.s32.totalorder %s158, %s159
    %p171 = scmp.eq.s32.totalorder %s35, 1
    %p172 = por %p170, %p171
    %p174 = scmp.ne.s32.totalorder %s159, %s173
    %p175 = scmp.eq.s32.totalorder %s35, 0
    %p176 = por %p174, %p175
    %s178 = sadd.s32 %s177, 1
    %p181 = scmp.eq.s32.totalorder %s29, 1
    %p182 = scmp.ne.s32.totalorder %s177, %s179
    %p183 = scmp.eq.s32.totalorder %s29, 0
    %p184 = por %p182, %p183
    %p185 = scmp.ne.s32.totalorder %s177, %s179
    %p186 = scmp.eq.s32.totalorder %s34, 1
    %p187 = por %p185, %p186
    %p188 = scmp.ne.s32.totalorder %s179, %s180
    %p189 = scmp.eq.s32.totalorder %s34, 0
    %p190 = por %p188, %p189
    %p191 = scmp.ne.s32.totalorder %s179, %s180
    %p192 = scmp.eq.s32.totalorder %s35, 1
    %p193 = por %p191, %p192
    %p195 = scmp.ne.s32.totalorder %s180, %s194
    %p196 = scmp.eq.s32.totalorder %s35, 0
    %p197 = por %p195, %p196
    %s199 = sadd.s32 %s198, 1
    %p202 = scmp.eq.s32.totalorder %s29, 1
    %p203 = scmp.ne.s32.totalorder %s198, %s200
    %p204 = scmp.eq.s32.totalorder %s29, 0
    %p205 = por %p203, %p204
    %p206 = scmp.ne.s32.totalorder %s198, %s200
    %p207 = scmp.eq.s32.totalorder %s34, 1
    %p208 = por %p206, %p207
    %p209 = scmp.ne.s32.totalorder %s200, %s201
    %p210 = scmp.eq.s32.totalorder %s34, 0
    %p211 = por %p209, %p210
    %p212 = scmp.ne.s32.totalorder %s200, %s201
    %p213 = scmp.eq.s32.totalorder %s35, 1
    %p214 = por %p212, %p213
    %p216 = scmp.ne.s32.totalorder %s201, %s215
    %p217 = scmp.eq.s32.totalorder %s35, 0
    %p218 = por %p216, %p217
    %s219 = ssub.s32 %s36, %s48
    %p220 = scmp.eq.s32.totalorder %s219, 0
    %s222 = sadd.s32 %s221, 1
    %s223 = scalar_select %p220, %s221, %s222
    %p226 = pneg %p220
    %p227 = scmp.eq.s32.totalorder %s29, 1
    %p228 = por %p226, %p227
    %p229 = scmp.ne.s32.totalorder %s221, %s224
    %p230 = scmp.eq.s32.totalorder %s29, 0
    %p231 = por %p229, %p230
    %p232 = scmp.ne.s32.totalorder %s221, %s224
    %p233 = scmp.eq.s32.totalorder %s34, 1
    %p234 = por %p232, %p233
    %p235 = scmp.ne.s32.totalorder %s224, %s225
    %p236 = scmp.eq.s32.totalorder %s34, 0
    %p237 = por %p235, %p236
    %p238 = scmp.ne.s32.totalorder %s224, %s225
    %p239 = scmp.eq.s32.totalorder %s35, 1
    %p240 = por %p238, %p239
    %p242 = scmp.ne.s32.totalorder %s225, %s241
    %p243 = scmp.eq.s32.totalorder %s35, 0
    %p244 = por %p242, %p243
    %s245 = ssub.s32 %s36, %s48
    %p246 = scmp.eq.s32.totalorder %s245, 0
    %s248 = sadd.s32 %s247, 1
    %s249 = scalar_select %p246, %s247, %s248
    %p252 = pneg %p246
    %p253 = scmp.eq.s32.totalorder %s29, 1
    %p254 = por %p252, %p253
    %p255 = scmp.ne.s32.totalorder %s247, %s250
    %p256 = scmp.eq.s32.totalorder %s29, 0
    %p257 = por %p255, %p256
    %p258 = scmp.ne.s32.totalorder %s247, %s250
    %p259 = scmp.eq.s32.totalorder %s34, 1
    %p260 = por %p258, %p259
    %p261 = scmp.ne.s32.totalorder %s250, %s251
    %p262 = scmp.eq.s32.totalorder %s34, 0
    %p263 = por %p261, %p262
    %p264 = scmp.ne.s32.totalorder %s250, %s251
    %p265 = scmp.eq.s32.totalorder %s35, 1
    %p266 = por %p264, %p265
    %p268 = scmp.ne.s32.totalorder %s251, %s267
    %p269 = scmp.eq.s32.totalorder %s35, 0
    %p270 = por %p268, %p269
    %p271 = scmp.le.s32.totalorder 1, %s29
    %p272 = scmp.lt.s32.totalorder %s29, 3
    %p273 = pnand %p271, %p272
    %p274 = pneg %p273
    // Predicated region
    $region9: #{gconv_forward.4} parent=5 // pred_check
      _
    $region10: #{gconv_forward.4} parent=5 // pred_check_branch
      %276 = sbr.rel (%p273) target = $region12
    $region11: #{gconv_forward.4} parent=5 // pred_region
      %s277 = ssub.s32 %s29, 1
      // Predicated region
      $region13: #{gconv_forward.4} parent=11 // pred_check
        %p278 = pneg %p148
      $region14: #{gconv_forward.4} parent=11 // pred_check_branch
        %280 = sbr.rel (%p278) target = $region16
      $region15: #{gconv_forward.4} parent=11 // pred_region
        _
      $region16: #{gconv_forward.4} parent=11 // pred_fallthru
        _
      // Predicated region
      $region17: #{gconv_forward.4} parent=11 // pred_check
        %p281 = pneg %p169
      $region18: #{gconv_forward.4} parent=11 // pred_check_branch
        %283 = sbr.rel (%p281) target = $region20
      $region19: #{gconv_forward.4} parent=11 // pred_region
        _
      $region20: #{gconv_forward.4} parent=11 // pred_fallthru
        _
      // Predicated region
      $region21: #{gconv_forward.4} parent=11 // pred_check
        %p284 = pneg %p190
      $region22: #{gconv_forward.4} parent=11 // pred_check_branch
        %286 = sbr.rel (%p284) target = $region24
      $region23: #{gconv_forward.4} parent=11 // pred_region
        _
      $region24: #{gconv_forward.4} parent=11 // pred_fallthru
        _
      // Predicated region
      $region25: #{gconv_forward.4} parent=11 // pred_check
        %p287 = pneg %p211
      $region26: #{gconv_forward.4} parent=11 // pred_check_branch
        %289 = sbr.rel (%p287) target = $region28
      $region27: #{gconv_forward.4} parent=11 // pred_region
        _
      $region28: #{gconv_forward.4} parent=11 // pred_fallthru
        _
    $region12: #{gconv_forward.4} parent=5 // pred_fallthru
      _
    %p290 = scmp.lt.s32.totalorder %s29, 2
    // Predicated region
    $region29: #{gconv_forward.4} parent=5 // pred_check
      %p291 = pneg %p290
    $region30: #{gconv_forward.4} parent=5 // pred_check_branch
      %293 = sbr.rel (%p291) target = $region32
    $region31: #{gconv_forward.4} parent=5 // pred_region
      // Predicated region
      $region33: #{gconv_forward.4} parent=31 // pred_check
        %p294 = pneg %p79
      $region34: #{gconv_forward.4} parent=31 // pred_check_branch
        %296 = sbr.rel (%p294) target = $region36
      $region35: #{gconv_forward.4} parent=31 // pred_region
        %s297 = sshra.s32 %s37, 7
        %s298 = sand.u32 %s37, 127
        %s299 = sadd.s32 %s297, %s36
        %s300 = smul.u32 %s299, 128
        %s301 = sshra.s32 %s37, 7
        %s302 = sand.u32 %s37, 127
        %s303 = sadd.s32 %s300, %s302
        %s304 = sld [smem:[#allocation4 + %s303]]
        %s305 = smul.u32 16, %s36
        %s306 = smul.u32 2, %s304
        %p307 = scmp.lt.s32.totalorder %s305, 31
        %s308 = scalar_select %p307, %s305, 31
        %p309 = scmp.lt.s32.totalorder %s306, 1
        %s310 = scalar_select %p309, %s306, 1
        %s311 = smul.addr %s308, 2
        %s312 = sadd.s32 %s310, %s311
        %s313 = smul.addr %s312, 4
        %s314 = scalar_lea.vmem %s2, %s313
        %s315 = sshra.s32 %s37, 7
        %s316 = sand.u32 %s37, 127
        %s317 = sadd.s32 %s315, %s36
        %s318 = smul.u32 %s317, 128
        %s319 = sshra.s32 %s37, 7
        %s320 = sand.u32 %s37, 127
        %s321 = sadd.s32 %s318, %s320
        %s322 = sld [smem:[#allocation4 + %s321]]
        %s323 = smul.u32 16, %s36
        %s324 = smul.u32 2, %s322
      $region36: #{gconv_forward.4} parent=31 // pred_fallthru
        _
      // Predicated region
      $region37: #{gconv_forward.4} parent=31 // pred_check
        %p325 = pneg %p121
      $region38: #{gconv_forward.4} parent=31 // pred_check_branch
        %327 = sbr.rel (%p325) target = $region40
      $region39: #{gconv_forward.4} parent=31 // pred_region
        %s328 = sshra.s32 %s37, 7
        %s329 = sand.u32 %s37, 127
        %s330 = sadd.s32 %s328, %s36
        %s331 = smul.u32 %s330, 128
        %s332 = sshra.s32 %s37, 7
        %s333 = sand.u32 %s37, 127
        %s334 = sadd.s32 %s331, %s333
        %s335 = sld [smem:[#allocation4 + %s334]]
        %s336 = smul.u32 32, %s335
        %p337 = scmp.lt.s32.totalorder %s336, 31
        %s338 = scalar_select %p337, %s336, 31
        %s339 = smul.addr %s338, 4
        %s340 = scalar_lea.vmem %s3, %s339
        %s341 = sshra.s32 %s37, 7
        %s342 = sand.u32 %s37, 127
        %s343 = sadd.s32 %s341, %s36
        %s344 = smul.u32 %s343, 128
        %s345 = sshra.s32 %s37, 7
        %s346 = sand.u32 %s37, 127
        %s347 = sadd.s32 %s344, %s346
        %s348 = sld [smem:[#allocation4 + %s347]]
        %s349 = smul.u32 32, %s348
      $region40: #{gconv_forward.4} parent=31 // pred_fallthru
        _
    $region32: #{gconv_forward.4} parent=5 // pred_fallthru
      _
    %p350 = scmp.le.s32.totalorder 1, %s29
    %p351 = scmp.lt.s32.totalorder %s29, 3
    %p352 = pnand %p350, %p351
    %p353 = pneg %p352
    // Predicated region
    $region41: #{gconv_forward.4} parent=5 // pred_check
      _
    $region42: #{gconv_forward.4} parent=5 // pred_check_branch
      %355 = sbr.rel (%p352) target = $region44
    $region43: #{gconv_forward.4} parent=5 // pred_region
      %s356 = ssub.s32 %s29, 1
      %s357 = sshra.s32 %s39, 7
      %s358 = sand.u32 %s39, 127
      %s359 = sadd.s32 %s357, %s38
      %s360 = smul.u32 %s359, 128
      %s361 = sshra.s32 %s39, 7
      %s362 = sand.u32 %s39, 127
      %s363 = sadd.s32 %s360, %s362
      %s364 = sld [smem:[#allocation4 + %s363]]
      %s365 = smul.u32 16, %s38
      %s366 = smul.u32 2, %s364
      %p367 = scmp.lt.s32.totalorder %s365, 31
      %s368 = scalar_select %p367, %s365, 31
      %p369 = scmp.lt.s32.totalorder %s366, 1
      %s370 = scalar_select %p369, %s366, 1
      %s371 = smul.addr %s368, 2
      %s372 = sadd.s32 %s370, %s371
      %s373 = smul.addr %s372, 4
      %s374 = scalar_lea.vmem %s2, %s373
      %p375 = pneg %p85
      %p376 = pneg %p82
      %s377 = sshra.s32 %s39, 7
      %s378 = sand.u32 %s39, 127
      %s379 = sadd.s32 %s377, %s38
      %s380 = smul.u32 %s379, 128
      %s381 = sshra.s32 %s39, 7
      %s382 = sand.u32 %s39, 127
      %s383 = sadd.s32 %s380, %s382
      %s384 = sld [smem:[#allocation4 + %s383]]
      %s385 = smul.u32 32, %s384
      %p386 = scmp.lt.s32.totalorder %s385, 31
      %s387 = scalar_select %p386, %s385, 31
      %s388 = smul.addr %s387, 4
      %s389 = scalar_lea.vmem %s3, %s388
      %p390 = pneg %p127
      %p391 = pneg %p124
      %p392 = pneg %p148
      %p393 = pneg %p145
      %p394 = pneg %p169
      %p395 = pneg %p166
      %p396 = pneg %p190
      %p397 = pneg %p187
      %p398 = pneg %p211
      %p399 = pneg %p208
      %p400 = pneg %p237
      %p401 = pneg %p234
      %s402 = smul.u32 16, %s38
      %p403 = scmp.lt.s32.totalorder %s402, 31
      %s404 = scalar_select %p403, %s402, 31
      %s405 = smul.addr %s404, 8
      %s406 = scalar_lea.vmem %s8, %s405
      %p407 = pneg %p263
      %p408 = pneg %p260
      %p409 = scmp.lt.s32.totalorder %s38, 1
      %s410 = scalar_select %p409, %s38, 1
      %s411 = smul.addr %s410, 2
      %s412 = scalar_lea.vmem %s9, %s411
      %s413 = sshra.s32 %s39, 7
      %s414 = sand.u32 %s39, 127
      %s415 = sadd.s32 %s413, %s38
      %s416 = smul.u32 %s415, 128
      %s417 = sshra.s32 %s39, 7
      %s418 = sand.u32 %s39, 127
      %s419 = sadd.s32 %s416, %s418
      %s420 = sld [smem:[#allocation4 + %s419]]
      %s421 = smul.u32 16, %s38
      %s422 = smul.u32 2, %s420
      %p423 = scmp.lt.s32.totalorder %s421, 31
      %s424 = scalar_select %p423, %s421, 31
      %p425 = scmp.lt.s32.totalorder %s422, 1
      %s426 = scalar_select %p425, %s422, 1
      %s427 = smul.addr %s424, 2
      %s428 = sadd.s32 %s426, %s427
      %s429 = smul.addr %s428, 4
      %s430 = scalar_lea.vmem %s2, %s429
      %s431 = sshra.s32 %s39, 7
      %s432 = sand.u32 %s39, 127
      %s433 = sadd.s32 %s431, %s38
      %s434 = smul.u32 %s433, 128
      %s435 = sshra.s32 %s39, 7
      %s436 = sand.u32 %s39, 127
      %s437 = sadd.s32 %s434, %s436
      %s438 = sld [smem:[#allocation4 + %s437]]
      %s439 = smul.u32 16, %s38
      %s440 = smul.u32 2, %s438
      %s441 = sshra.s32 %s39, 7
      %s442 = sand.u32 %s39, 127
      %s443 = sadd.s32 %s441, %s38
      %s444 = smul.u32 %s443, 128
      %s445 = sshra.s32 %s39, 7
      %s446 = sand.u32 %s39, 127
      %s447 = sadd.s32 %s444, %s446
      %s448 = sld [smem:[#allocation4 + %s447]]
      %s449 = smul.u32 32, %s448
      %p450 = scmp.lt.s32.totalorder %s449, 31
      %s451 = scalar_select %p450, %s449, 31
      %s452 = smul.addr %s451, 4
      %s453 = scalar_lea.vmem %s3, %s452
      %s454 = sshra.s32 %s39, 7
      %s455 = sand.u32 %s39, 127
      %s456 = sadd.s32 %s454, %s38
      %s457 = smul.u32 %s456, 128
      %s458 = sshra.s32 %s39, 7
      %s459 = sand.u32 %s39, 127
      %s460 = sadd.s32 %s457, %s459
      %s461 = sld [smem:[#allocation4 + %s460]]
      %s462 = smul.u32 32, %s461
      %s463 = smul.u32 16, %s38
      %p464 = scmp.lt.s32.totalorder %s463, 31
      %s465 = scalar_select %p464, %s463, 31
      %s466 = smul.addr %s465, 8
      %s467 = scalar_lea.vmem %s8, %s466
      %s468 = smul.u32 16, %s38
      %p469 = scmp.lt.s32.totalorder %s38, 1
      %s470 = scalar_select %p469, %s38, 1
      %s471 = smul.addr %s470, 2
      %s472 = scalar_lea.vmem %s9, %s471
      %p473 = scmp.eq.s32.totalorder %s39, 0
      // Predicated region
      $region45: #{gconv_forward.4} parent=43 // pred_check
        %p474 = pneg %p473
      $region46: #{gconv_forward.4} parent=43 // pred_check_branch
        %476 = sbr.rel (%p474) target = $region48
      $region47: #{gconv_forward.4} parent=43 // pred_region
        %477 = vst [vmem:[#allocation2] sm:$0xff] 0.0
        %478 = vst [vmem:[#allocation2 + $0x8] sm:$0xff] 0.0
        %479 = vst [vmem:[#allocation2 + $0x10] sm:$0xff] 0.0
        %480 = vst [vmem:[#allocation2 + $0x18] sm:$0xff] 0.0
        %481 = vst [vmem:[#allocation2 + $0x20] sm:$0xff] 0.0
        %482 = vst [vmem:[#allocation2 + $0x28] sm:$0xff] 0.0
        %483 = vst [vmem:[#allocation2 + $0x30] sm:$0xff] 0.0
        %484 = vst [vmem:[#allocation2 + $0x38] sm:$0xff] 0.0
        %485 = vst [vmem:[#allocation2 + $0x40] sm:$0xff] 0.0
        %486 = vst [vmem:[#allocation2 + $0x48] sm:$0xff] 0.0
        %487 = vst [vmem:[#allocation2 + $0x50] sm:$0xff] 0.0
        %488 = vst [vmem:[#allocation2 + $0x58] sm:$0xff] 0.0
        %489 = vst [vmem:[#allocation2 + $0x60] sm:$0xff] 0.0
        %490 = vst [vmem:[#allocation2 + $0x68] sm:$0xff] 0.0
        %491 = vst [vmem:[#allocation2 + $0x70] sm:$0xff] 0.0
        %492 = vst [vmem:[#allocation2 + $0x78] sm:$0xff] 0.0
      $region48: #{gconv_forward.4} parent=43 // pred_fallthru
        _
      %s493 = sld [smem:[#allocation5 + %s38]]
      %p494 = scmp.lt.s32.totalorder %s39, %s493
      // Predicated region
      $region49: #{gconv_forward.4} parent=43 // pred_check
        %p495 = pneg %p494
      $region50: #{gconv_forward.4} parent=43 // pred_check_branch
        %497 = sbr.rel (%p495) target = $region52
      $region51: #{gconv_forward.4} parent=43 // pred_region
        %v498 = vld [vmem:[#allocation2] sm:$0xff]
        %v499 = vld [vmem:[#allocation2 + $0x8] sm:$0xff]
        %v500 = vld [vmem:[#allocation2 + $0x10] sm:$0xff]
        %v501 = vld [vmem:[#allocation2 + $0x18] sm:$0xff]
        %v502 = vld [vmem:[#allocation2 + $0x20] sm:$0xff]
        %v503 = vld [vmem:[#allocation2 + $0x28] sm:$0xff]
        %v504 = vld [vmem:[#allocation2 + $0x30] sm:$0xff]
        %v505 = vld [vmem:[#allocation2 + $0x38] sm:$0xff]
        %v506 = vld [vmem:[#allocation2 + $0x40] sm:$0xff]
        %v507 = vld [vmem:[#allocation2 + $0x48] sm:$0xff]
        %v508 = vld [vmem:[#allocation2 + $0x50] sm:$0xff]
        %v509 = vld [vmem:[#allocation2 + $0x58] sm:$0xff]
        %v510 = vld [vmem:[#allocation2 + $0x60] sm:$0xff]
        %v511 = vld [vmem:[#allocation2 + $0x68] sm:$0xff]
        %v512 = vld [vmem:[#allocation2 + $0x70] sm:$0xff]
        %v513 = vld [vmem:[#allocation2 + $0x78] sm:$0xff]
        %v514 = vld [vmem:[%s430] sm:$0xff]
        %v515 = vld [vmem:[%s430 + $0x8] sm:$0xff]
        %v516 = vld [vmem:[%s430 + $0x10] sm:$0xff]
        %v517 = vld [vmem:[%s430 + $0x18] sm:$0xff]
        %v518 = vld [vmem:[%s430 + $0x20] sm:$0xff]
        %v519 = vld [vmem:[%s430 + $0x28] sm:$0xff]
        %v520 = vld [vmem:[%s430 + $0x30] sm:$0xff]
        %v521 = vld [vmem:[%s430 + $0x38] sm:$0xff]
        %v522 = vld [vmem:[%s430 + $0x40] sm:$0xff]
        %v523 = vld [vmem:[%s430 + $0x48] sm:$0xff]
        %v524 = vld [vmem:[%s430 + $0x50] sm:$0xff]
        %v525 = vld [vmem:[%s430 + $0x58] sm:$0xff]
        %v526 = vld [vmem:[%s430 + $0x60] sm:$0xff]
        %v527 = vld [vmem:[%s430 + $0x68] sm:$0xff]
        %v528 = vld [vmem:[%s430 + $0x70] sm:$0xff]
        %v529 = vld [vmem:[%s430 + $0x78] sm:$0xff]
        %v530 = vld [vmem:[%s453] sm:$0xf]
        %v531 = vld [vmem:[%s453 + $0x4] sm:$0xf]
        %v532 = vld [vmem:[%s453 + $0x8] sm:$0xf]
        %v533 = vld [vmem:[%s453 + $0xc] sm:$0xf]
        %v534 = vld [vmem:[%s453 + $0x10] sm:$0xf]
        %v535 = vld [vmem:[%s453 + $0x14] sm:$0xf]
        %v536 = vld [vmem:[%s453 + $0x18] sm:$0xf]
        %v537 = vld [vmem:[%s453 + $0x1c] sm:$0xf]
        %v538 = vld [vmem:[%s453 + $0x20] sm:$0xf]
        %v539 = vld [vmem:[%s453 + $0x24] sm:$0xf]
        %v540 = vld [vmem:[%s453 + $0x28] sm:$0xf]
        %v541 = vld [vmem:[%s453 + $0x2c] sm:$0xf]
        %v542 = vld [vmem:[%s453 + $0x30] sm:$0xf]
        %v543 = vld [vmem:[%s453 + $0x34] sm:$0xf]
        %v544 = vld [vmem:[%s453 + $0x38] sm:$0xf]
        %v545 = vld [vmem:[%s453 + $0x3c] sm:$0xf]
        %v546 = vld [vmem:[%s453 + $0x40] sm:$0xf]
        %v547 = vld [vmem:[%s453 + $0x44] sm:$0xf]
        %v548 = vld [vmem:[%s453 + $0x48] sm:$0xf]
        %v549 = vld [vmem:[%s453 + $0x4c] sm:$0xf]
        %v550 = vld [vmem:[%s453 + $0x50] sm:$0xf]
        %v551 = vld [vmem:[%s453 + $0x54] sm:$0xf]
        %v552 = vld [vmem:[%s453 + $0x58] sm:$0xf]
        %v553 = vld [vmem:[%s453 + $0x5c] sm:$0xf]
        %v554 = vld [vmem:[%s453 + $0x60] sm:$0xf]
        %v555 = vld [vmem:[%s453 + $0x64] sm:$0xf]
        %v556 = vld [vmem:[%s453 + $0x68] sm:$0xf]
        %v557 = vld [vmem:[%s453 + $0x6c] sm:$0xf]
        %v558 = vld [vmem:[%s453 + $0x70] sm:$0xf]
        %v559 = vld [vmem:[%s453 + $0x74] sm:$0xf]
        %v560 = vld [vmem:[%s453 + $0x78] sm:$0xf]
        %v561 = vld [vmem:[%s453 + $0x7c] sm:$0xf]
        %v578 = vunpack.c.l.b16 %v514
        %v579 = vunpack.c.h.b16 %v514
        %v580 = vunpack.c.l.b16 %v515
        %v581 = vunpack.c.h.b16 %v515
        %v582 = vunpack.c.l.b16 %v516
        %v583 = vunpack.c.h.b16 %v516
        %v584 = vunpack.c.l.b16 %v517
        %v585 = vunpack.c.h.b16 %v517
        %v586 = vunpack.c.l.b16 %v518
        %v587 = vunpack.c.h.b16 %v518
        %v588 = vunpack.c.l.b16 %v519
        %v589 = vunpack.c.h.b16 %v519
        %v590 = vunpack.c.l.b16 %v520
        %v591 = vunpack.c.h.b16 %v520
        %v592 = vunpack.c.l.b16 %v521
        %v593 = vunpack.c.h.b16 %v521
        %v594 = vunpack.c.l.b16 %v522
        %v595 = vunpack.c.h.b16 %v522
        %v596 = vunpack.c.l.b16 %v523
        %v597 = vunpack.c.h.b16 %v523
        %v598 = vunpack.c.l.b16 %v524
        %v599 = vunpack.c.h.b16 %v524
        %v600 = vunpack.c.l.b16 %v525
        %v601 = vunpack.c.h.b16 %v525
        %v602 = vunpack.c.l.b16 %v526
        %v603 = vunpack.c.h.b16 %v526
        %v604 = vunpack.c.l.b16 %v527
        %v605 = vunpack.c.h.b16 %v527
        %v606 = vunpack.c.l.b16 %v528
        %v607 = vunpack.c.h.b16 %v528
        %v608 = vunpack.c.l.b16 %v529
        %v609 = vunpack.c.h.b16 %v529
        %v610 = vpack.c.b16 %v580, %v578
        %v611 = vpack.c.b16 %v581, %v579
        %v612 = vpack.c.b16 %v584, %v582
        %v613 = vpack.c.b16 %v585, %v583
        %v614 = vpack.c.b16 %v588, %v586
        %v615 = vpack.c.b16 %v589, %v587
        %v616 = vpack.c.b16 %v592, %v590
        %v617 = vpack.c.b16 %v593, %v591
        %v618 = vpack.c.b16 %v596, %v594
        %v619 = vpack.c.b16 %v597, %v595
        %v620 = vpack.c.b16 %v600, %v598
        %v621 = vpack.c.b16 %v601, %v599
        %v622 = vpack.c.b16 %v604, %v602
        %v623 = vpack.c.b16 %v605, %v603
        %v624 = vpack.c.b16 %v608, %v606
        %v625 = vpack.c.b16 %v609, %v607
        %v674 = vunpack.c.l.b16 %v530
        %v675 = vunpack.c.l.b16 %v531
        %v676 = vunpack.c.l.b16 %v532
        %v677 = vunpack.c.l.b16 %v533
        %v678 = vunpack.c.l.b16 %v534
        %v679 = vunpack.c.l.b16 %v535
        %v680 = vunpack.c.l.b16 %v536
        %v681 = vunpack.c.l.b16 %v537
        %v682 = vunpack.c.l.b16 %v538
        %v683 = vunpack.c.l.b16 %v539
        %v684 = vunpack.c.l.b16 %v540
        %v685 = vunpack.c.l.b16 %v541
        %v686 = vunpack.c.l.b16 %v542
        %v687 = vunpack.c.l.b16 %v543
        %v688 = vunpack.c.l.b16 %v544
        %v689 = vunpack.c.l.b16 %v545
        %v690 = vunpack.c.l.b16 %v546
        %v691 = vunpack.c.l.b16 %v547
        %v692 = vunpack.c.l.b16 %v548
        %v693 = vunpack.c.l.b16 %v549
        %v694 = vunpack.c.l.b16 %v550
        %v695 = vunpack.c.l.b16 %v551
        %v696 = vunpack.c.l.b16 %v552
        %v697 = vunpack.c.l.b16 %v553
        %v698 = vunpack.c.l.b16 %v554
        %v699 = vunpack.c.l.b16 %v555
        %v700 = vunpack.c.l.b16 %v556
        %v701 = vunpack.c.l.b16 %v557
        %v702 = vunpack.c.l.b16 %v558
        %v703 = vunpack.c.l.b16 %v559
        %v704 = vunpack.c.l.b16 %v560
        %v705 = vunpack.c.l.b16 %v561
        %v706 = vpack.c.b16 %v675, %v674
        %v707 = vpack.c.b16 %v677, %v676
        %v708 = vpack.c.b16 %v679, %v678
        %v709 = vpack.c.b16 %v681, %v680
        %v710 = vpack.c.b16 %v683, %v682
        %v711 = vpack.c.b16 %v685, %v684
        %v712 = vpack.c.b16 %v687, %v686
        %v713 = vpack.c.b16 %v689, %v688
        %v714 = vpack.c.b16 %v691, %v690
        %v715 = vpack.c.b16 %v693, %v692
        %v716 = vpack.c.b16 %v695, %v694
        %v717 = vpack.c.b16 %v697, %v696
        %v718 = vpack.c.b16 %v699, %v698
        %v719 = vpack.c.b16 %v701, %v700
        %v720 = vpack.c.b16 %v703, %v702
        %v721 = vpack.c.b16 %v705, %v704
        %738 = vmatpush.bf16.msra.mxu0 %v713
        %739 = vmatpush.bf16.msra.mxu0 %v712
        %740 = vmatpush.bf16.msra.mxu0 %v711
        %741 = vmatpush.bf16.msra.mxu0 %v710
        %742 = vmatpush.bf16.msra.mxu0 %v709
        %743 = vmatpush.bf16.msra.mxu0 %v708
        %744 = vmatpush.bf16.msra.mxu0 %v707
        %745 = vmatpush.bf16.msra.mxu0 %v706
        %746 = vmatmul.bf16.gmra.mxu0 %v610
        %v747 = vpop.f32.mrf.mxu0
        %v748 = vadd.f32 0.0, %v747
        %v749 = vpop.f32.mrf.mxu0
        %v750 = vadd.f32 0.0, %v749
        %751 = vmatmul.bf16.gmra.mxu0 %v612
        %v752 = vpop.f32.mrf.mxu0
        %v753 = vadd.f32 0.0, %v752
        %v754 = vpop.f32.mrf.mxu0
        %v755 = vadd.f32 0.0, %v754
        %756 = vmatmul.bf16.gmra.mxu0 %v614
        %v757 = vpop.f32.mrf.mxu0
        %v758 = vadd.f32 0.0, %v757
        %v759 = vpop.f32.mrf.mxu0
        %v760 = vadd.f32 0.0, %v759
        %761 = vmatmul.bf16.gmra.mxu0 %v616
        %v762 = vpop.f32.mrf.mxu0
        %v763 = vadd.f32 0.0, %v762
        %v764 = vpop.f32.mrf.mxu0
        %v765 = vadd.f32 0.0, %v764
        %766 = vmatmul.bf16.gmra.mxu0 %v618
        %v767 = vpop.f32.mrf.mxu0
        %v768 = vadd.f32 0.0, %v767
        %v769 = vpop.f32.mrf.mxu0
        %v770 = vadd.f32 0.0, %v769
        %771 = vmatmul.bf16.gmra.mxu0 %v620
        %v772 = vpop.f32.mrf.mxu0
        %v773 = vadd.f32 0.0, %v772
        %v774 = vpop.f32.mrf.mxu0
        %v775 = vadd.f32 0.0, %v774
        %776 = vmatmul.bf16.gmra.mxu0 %v622
        %v777 = vpop.f32.mrf.mxu0
        %v778 = vadd.f32 0.0, %v777
        %v779 = vpop.f32.mrf.mxu0
        %v780 = vadd.f32 0.0, %v779
        %781 = vmatmul.bf16.gmra.mxu0 %v624
        %v782 = vpop.f32.mrf.mxu0
        %v783 = vadd.f32 0.0, %v782
        %v784 = vpop.f32.mrf.mxu0
        %v785 = vadd.f32 0.0, %v784
        %786 = vdwg.mxu0
        %787 = vmatpush.bf16.msra.mxu0 %v721
        %788 = vmatpush.bf16.msra.mxu0 %v720
        %789 = vmatpush.bf16.msra.mxu0 %v719
        %790 = vmatpush.bf16.msra.mxu0 %v718
        %791 = vmatpush.bf16.msra.mxu0 %v717
        %792 = vmatpush.bf16.msra.mxu0 %v716
        %793 = vmatpush.bf16.msra.mxu0 %v715
        %794 = vmatpush.bf16.msra.mxu0 %v714
        %795 = vmatmul.bf16.gmra.mxu0 %v611
        %v796 = vpop.f32.mrf.mxu0
        %v797 = vadd.f32 %v748, %v796
        %v798 = vpop.f32.mrf.mxu0
        %v799 = vadd.f32 %v750, %v798
        %800 = vmatmul.bf16.gmra.mxu0 %v613
        %v801 = vpop.f32.mrf.mxu0
        %v802 = vadd.f32 %v753, %v801
        %v803 = vpop.f32.mrf.mxu0
        %v804 = vadd.f32 %v755, %v803
        %805 = vmatmul.bf16.gmra.mxu0 %v615
        %v806 = vpop.f32.mrf.mxu0
        %v807 = vadd.f32 %v758, %v806
        %v808 = vpop.f32.mrf.mxu0
        %v809 = vadd.f32 %v760, %v808
        %810 = vmatmul.bf16.gmra.mxu0 %v617
        %v811 = vpop.f32.mrf.mxu0
        %v812 = vadd.f32 %v763, %v811
        %v813 = vpop.f32.mrf.mxu0
        %v814 = vadd.f32 %v765, %v813
        %815 = vmatmul.bf16.gmra.mxu0 %v619
        %v816 = vpop.f32.mrf.mxu0
        %v817 = vadd.f32 %v768, %v816
        %v818 = vpop.f32.mrf.mxu0
        %v819 = vadd.f32 %v770, %v818
        %820 = vmatmul.bf16.gmra.mxu0 %v621
        %v821 = vpop.f32.mrf.mxu0
        %v822 = vadd.f32 %v773, %v821
        %v823 = vpop.f32.mrf.mxu0
        %v824 = vadd.f32 %v775, %v823
        %825 = vmatmul.bf16.gmra.mxu0 %v623
        %v826 = vpop.f32.mrf.mxu0
        %v827 = vadd.f32 %v778, %v826
        %v828 = vpop.f32.mrf.mxu0
        %v829 = vadd.f32 %v780, %v828
        %830 = vmatmul.bf16.gmra.mxu0 %v625
        %v831 = vpop.f32.mrf.mxu0
        %v832 = vadd.f32 %v783, %v831
        %v833 = vpop.f32.mrf.mxu0
        %v834 = vadd.f32 %v785, %v833
        %835 = vdwg.mxu0
        %v836 = vadd.f32 %v498, %v797
        %v837 = vadd.f32 %v499, %v799
        %v838 = vadd.f32 %v500, %v802
        %v839 = vadd.f32 %v501, %v804
        %v840 = vadd.f32 %v502, %v807
        %v841 = vadd.f32 %v503, %v809
        %v842 = vadd.f32 %v504, %v812
        %v843 = vadd.f32 %v505, %v814
        %v844 = vadd.f32 %v506, %v817
        %v845 = vadd.f32 %v507, %v819
        %v846 = vadd.f32 %v508, %v822
        %v847 = vadd.f32 %v509, %v824
        %v848 = vadd.f32 %v510, %v827
        %v849 = vadd.f32 %v511, %v829
        %v850 = vadd.f32 %v512, %v832
        %v851 = vadd.f32 %v513, %v834
        %852 = vst [vmem:[#allocation2] sm:$0xff] %v836
        %853 = vst [vmem:[#allocation2 + $0x8] sm:$0xff] %v837
        %854 = vst [vmem:[#allocation2 + $0x10] sm:$0xff] %v838
        %855 = vst [vmem:[#allocation2 + $0x18] sm:$0xff] %v839
        %856 = vst [vmem:[#allocation2 + $0x20] sm:$0xff] %v840
        %857 = vst [vmem:[#allocation2 + $0x28] sm:$0xff] %v841
        %858 = vst [vmem:[#allocation2 + $0x30] sm:$0xff] %v842
        %859 = vst [vmem:[#allocation2 + $0x38] sm:$0xff] %v843
        %860 = vst [vmem:[#allocation2 + $0x40] sm:$0xff] %v844
        %861 = vst [vmem:[#allocation2 + $0x48] sm:$0xff] %v845
        %862 = vst [vmem:[#allocation2 + $0x50] sm:$0xff] %v846
        %863 = vst [vmem:[#allocation2 + $0x58] sm:$0xff] %v847
        %864 = vst [vmem:[#allocation2 + $0x60] sm:$0xff] %v848
        %865 = vst [vmem:[#allocation2 + $0x68] sm:$0xff] %v849
        %866 = vst [vmem:[#allocation2 + $0x70] sm:$0xff] %v850
        %867 = vst [vmem:[#allocation2 + $0x78] sm:$0xff] %v851
      $region52: #{gconv_forward.4} parent=43 // pred_fallthru
        _
      // Predicated region
      $region53: #{gconv_forward.4} parent=43 // pred_check
        %p868 = pneg %p473
      $region54: #{gconv_forward.4} parent=43 // pred_check_branch
        %870 = sbr.rel (%p868) target = $region56
      $region55: #{gconv_forward.4} parent=43 // pred_region
        %v871 = vld [vmem:[#allocation2] sm:$0xff]
        %v872 = vld [vmem:[#allocation2 + $0x8] sm:$0xff]
        %v873 = vld [vmem:[#allocation2 + $0x10] sm:$0xff]
        %v874 = vld [vmem:[#allocation2 + $0x18] sm:$0xff]
        %v875 = vld [vmem:[#allocation2 + $0x20] sm:$0xff]
        %v876 = vld [vmem:[#allocation2 + $0x28] sm:$0xff]
        %v877 = vld [vmem:[#allocation2 + $0x30] sm:$0xff]
        %v878 = vld [vmem:[#allocation2 + $0x38] sm:$0xff]
        %v879 = vld [vmem:[#allocation2 + $0x40] sm:$0xff]
        %v880 = vld [vmem:[#allocation2 + $0x48] sm:$0xff]
        %v881 = vld [vmem:[#allocation2 + $0x50] sm:$0xff]
        %v882 = vld [vmem:[#allocation2 + $0x58] sm:$0xff]
        %v883 = vld [vmem:[#allocation2 + $0x60] sm:$0xff]
        %v884 = vld [vmem:[#allocation2 + $0x68] sm:$0xff]
        %v885 = vld [vmem:[#allocation2 + $0x70] sm:$0xff]
        %v886 = vld [vmem:[#allocation2 + $0x78] sm:$0xff]
        %v887 = vpack.c.bf16 %v872, %v871
        %v888 = vpack.c.bf16 %v874, %v873
        %v889 = vpack.c.bf16 %v876, %v875
        %v890 = vpack.c.bf16 %v878, %v877
        %v891 = vpack.c.bf16 %v880, %v879
        %v892 = vpack.c.bf16 %v882, %v881
        %v893 = vpack.c.bf16 %v884, %v883
        %v894 = vpack.c.bf16 %v886, %v885
        %v895 = vld [vmem:[%s4] sm:$0xf]
        %v896 = vld [vmem:[%s4 + $0x4] sm:$0xf]
        %v897 = vld [vmem:[%s4 + $0x8] sm:$0xf]
        %v898 = vld [vmem:[%s4 + $0xc] sm:$0xf]
        %v899 = vld [vmem:[%s4 + $0x10] sm:$0xf]
        %v900 = vld [vmem:[%s4 + $0x14] sm:$0xf]
        %v901 = vld [vmem:[%s4 + $0x18] sm:$0xf]
        %v902 = vld [vmem:[%s4 + $0x1c] sm:$0xf]
        %v903 = vld [vmem:[%s4 + $0x20] sm:$0xf]
        %v904 = vld [vmem:[%s4 + $0x24] sm:$0xf]
        %v905 = vld [vmem:[%s4 + $0x28] sm:$0xf]
        %v906 = vld [vmem:[%s4 + $0x2c] sm:$0xf]
        %v907 = vld [vmem:[%s4 + $0x30] sm:$0xf]
        %v908 = vld [vmem:[%s4 + $0x34] sm:$0xf]
        %v909 = vld [vmem:[%s4 + $0x38] sm:$0xf]
        %v910 = vld [vmem:[%s4 + $0x3c] sm:$0xf]
        %v911 = vld [vmem:[%s5] sm:$0x1]
        %v913 = vperm.slane %v911, 0
        %v931 = vunpack.c.l.b16 %v895
        %v932 = vunpack.c.l.b16 %v896
        %v933 = vunpack.c.l.b16 %v897
        %v934 = vunpack.c.l.b16 %v898
        %v935 = vunpack.c.l.b16 %v899
        %v936 = vunpack.c.l.b16 %v900
        %v937 = vunpack.c.l.b16 %v901
        %v938 = vunpack.c.l.b16 %v902
        %v939 = vunpack.c.l.b16 %v903
        %v940 = vunpack.c.l.b16 %v904
        %v941 = vunpack.c.l.b16 %v905
        %v942 = vunpack.c.l.b16 %v906
        %v943 = vunpack.c.l.b16 %v907
        %v944 = vunpack.c.l.b16 %v908
        %v945 = vunpack.c.l.b16 %v909
        %v946 = vunpack.c.l.b16 %v910
        %v947 = vpack.c.b16 %v932, %v931
        %v948 = vpack.c.b16 %v934, %v933
        %v949 = vpack.c.b16 %v936, %v935
        %v950 = vpack.c.b16 %v938, %v937
        %v951 = vpack.c.b16 %v940, %v939
        %v952 = vpack.c.b16 %v942, %v941
        %v953 = vpack.c.b16 %v944, %v943
        %v954 = vpack.c.b16 %v946, %v945
        %963 = vmatpush.bf16.msra.mxu0 %v954
        %964 = vmatpush.bf16.msra.mxu0 %v953
        %965 = vmatpush.bf16.msra.mxu0 %v952
        %966 = vmatpush.bf16.msra.mxu0 %v951
        %967 = vmatpush.bf16.msra.mxu0 %v950
        %968 = vmatpush.bf16.msra.mxu0 %v949
        %969 = vmatpush.bf16.msra.mxu0 %v948
        %970 = vmatpush.bf16.msra.mxu0 %v947
        %971 = vmatmul.bf16.gmra.mxu0 %v887
        %v972 = vpop.f32.mrf.mxu0
        %v973 = vadd.f32 %v913, %v972
        %v974 = vpop.f32.mrf.mxu0
        %v975 = vadd.f32 %v913, %v974
        %976 = vmatmul.bf16.gmra.mxu0 %v888
        %v977 = vpop.f32.mrf.mxu0
        %v978 = vadd.f32 %v913, %v977
        %v979 = vpop.f32.mrf.mxu0
        %v980 = vadd.f32 %v913, %v979
        %981 = vmatmul.bf16.gmra.mxu0 %v889
        %v982 = vpop.f32.mrf.mxu0
        %v983 = vadd.f32 %v913, %v982
        %v984 = vpop.f32.mrf.mxu0
        %v985 = vadd.f32 %v913, %v984
        %986 = vmatmul.bf16.gmra.mxu0 %v890
        %v987 = vpop.f32.mrf.mxu0
        %v988 = vadd.f32 %v913, %v987
        %v989 = vpop.f32.mrf.mxu0
        %v990 = vadd.f32 %v913, %v989
        %991 = vmatmul.bf16.gmra.mxu0 %v891
        %v992 = vpop.f32.mrf.mxu0
        %v993 = vadd.f32 %v913, %v992
        %v994 = vpop.f32.mrf.mxu0
        %v995 = vadd.f32 %v913, %v994
        %996 = vmatmul.bf16.gmra.mxu0 %v892
        %v997 = vpop.f32.mrf.mxu0
        %v998 = vadd.f32 %v913, %v997
        %v999 = vpop.f32.mrf.mxu0
        %v1000 = vadd.f32 %v913, %v999
        %1001 = vmatmul.bf16.gmra.mxu0 %v893
        %v1002 = vpop.f32.mrf.mxu0
        %v1003 = vadd.f32 %v913, %v1002
        %v1004 = vpop.f32.mrf.mxu0
        %v1005 = vadd.f32 %v913, %v1004
        %1006 = vmatmul.bf16.gmra.mxu0 %v894
        %v1007 = vpop.f32.mrf.mxu0
        %v1008 = vadd.f32 %v913, %v1007
        %v1009 = vpop.f32.mrf.mxu0
        %v1010 = vadd.f32 %v913, %v1009
        %1011 = vdwg.mxu0
        %v1012 = vmax.f32 %v973, 0.0
        %v1013 = vmax.f32 %v975, 0.0
        %v1014 = vmax.f32 %v978, 0.0
        %v1015 = vmax.f32 %v980, 0.0
        %v1016 = vmax.f32 %v983, 0.0
        %v1017 = vmax.f32 %v985, 0.0
        %v1018 = vmax.f32 %v988, 0.0
        %v1019 = vmax.f32 %v990, 0.0
        %v1020 = vmax.f32 %v993, 0.0
        %v1021 = vmax.f32 %v995, 0.0
        %v1022 = vmax.f32 %v998, 0.0
        %v1023 = vmax.f32 %v1000, 0.0
        %v1024 = vmax.f32 %v1003, 0.0
        %v1025 = vmax.f32 %v1005, 0.0
        %v1026 = vmax.f32 %v1008, 0.0
        %v1027 = vmax.f32 %v1010, 0.0
        %v1028 = vpack.c.bf16 %v1013, %v1012
        %v1029 = vpack.c.bf16 %v1015, %v1014
        %v1030 = vpack.c.bf16 %v1017, %v1016
        %v1031 = vpack.c.bf16 %v1019, %v1018
        %v1032 = vpack.c.bf16 %v1021, %v1020
        %v1033 = vpack.c.bf16 %v1023, %v1022
        %v1034 = vpack.c.bf16 %v1025, %v1024
        %v1035 = vpack.c.bf16 %v1027, %v1026
        %v1036 = vld [vmem:[%s6] sm:$0xf]
        %v1037 = vld [vmem:[%s6 + $0x4] sm:$0xf]
        %v1038 = vld [vmem:[%s6 + $0x8] sm:$0xf]
        %v1039 = vld [vmem:[%s6 + $0xc] sm:$0xf]
        %v1040 = vld [vmem:[%s6 + $0x10] sm:$0xf]
        %v1041 = vld [vmem:[%s6 + $0x14] sm:$0xf]
        %v1042 = vld [vmem:[%s6 + $0x18] sm:$0xf]
        %v1043 = vld [vmem:[%s6 + $0x1c] sm:$0xf]
        %v1044 = vld [vmem:[%s6 + $0x20] sm:$0xf]
        %v1045 = vld [vmem:[%s6 + $0x24] sm:$0xf]
        %v1046 = vld [vmem:[%s6 + $0x28] sm:$0xf]
        %v1047 = vld [vmem:[%s6 + $0x2c] sm:$0xf]
        %v1048 = vld [vmem:[%s6 + $0x30] sm:$0xf]
        %v1049 = vld [vmem:[%s6 + $0x34] sm:$0xf]
        %v1050 = vld [vmem:[%s6 + $0x38] sm:$0xf]
        %v1051 = vld [vmem:[%s6 + $0x3c] sm:$0xf]
        %v1052 = vld [vmem:[%s7] sm:$0x1]
        %v1054 = vperm.slane %v1052, 0
        %v1072 = vunpack.c.l.b16 %v1036
        %v1073 = vunpack.c.l.b16 %v1037
        %v1074 = vunpack.c.l.b16 %v1038
        %v1075 = vunpack.c.l.b16 %v1039
        %v1076 = vunpack.c.l.b16 %v1040
        %v1077 = vunpack.c.l.b16 %v1041
        %v1078 = vunpack.c.l.b16 %v1042
        %v1079 = vunpack.c.l.b16 %v1043
        %v1080 = vunpack.c.l.b16 %v1044
        %v1081 = vunpack.c.l.b16 %v1045
        %v1082 = vunpack.c.l.b16 %v1046
        %v1083 = vunpack.c.l.b16 %v1047
        %v1084 = vunpack.c.l.b16 %v1048
        %v1085 = vunpack.c.l.b16 %v1049
        %v1086 = vunpack.c.l.b16 %v1050
        %v1087 = vunpack.c.l.b16 %v1051
        %v1088 = vpack.c.b16 %v1073, %v1072
        %v1089 = vpack.c.b16 %v1075, %v1074
        %v1090 = vpack.c.b16 %v1077, %v1076
        %v1091 = vpack.c.b16 %v1079, %v1078
        %v1092 = vpack.c.b16 %v1081, %v1080
        %v1093 = vpack.c.b16 %v1083, %v1082
        %v1094 = vpack.c.b16 %v1085, %v1084
        %v1095 = vpack.c.b16 %v1087, %v1086
        %1104 = vmatpush.bf16.msra.mxu0 %v1095
        %1105 = vmatpush.bf16.msra.mxu0 %v1094
        %1106 = vmatpush.bf16.msra.mxu0 %v1093
        %1107 = vmatpush.bf16.msra.mxu0 %v1092
        %1108 = vmatpush.bf16.msra.mxu0 %v1091
        %1109 = vmatpush.bf16.msra.mxu0 %v1090
        %1110 = vmatpush.bf16.msra.mxu0 %v1089
        %1111 = vmatpush.bf16.msra.mxu0 %v1088
        %1112 = vmatmul.bf16.gmra.mxu0 %v1028
        %v1113 = vpop.f32.mrf.mxu0
        %v1114 = vadd.f32 %v1054, %v1113
        %v1115 = vpop.f32.mrf.mxu0
        %v1116 = vadd.f32 %v1054, %v1115
        %1117 = vmatmul.bf16.gmra.mxu0 %v1029
        %v1118 = vpop.f32.mrf.mxu0
        %v1119 = vadd.f32 %v1054, %v1118
        %v1120 = vpop.f32.mrf.mxu0
        %v1121 = vadd.f32 %v1054, %v1120
        %1122 = vmatmul.bf16.gmra.mxu0 %v1030
        %v1123 = vpop.f32.mrf.mxu0
        %v1124 = vadd.f32 %v1054, %v1123
        %v1125 = vpop.f32.mrf.mxu0
        %v1126 = vadd.f32 %v1054, %v1125
        %1127 = vmatmul.bf16.gmra.mxu0 %v1031
        %v1128 = vpop.f32.mrf.mxu0
        %v1129 = vadd.f32 %v1054, %v1128
        %v1130 = vpop.f32.mrf.mxu0
        %v1131 = vadd.f32 %v1054, %v1130
        %1132 = vmatmul.bf16.gmra.mxu0 %v1032
        %v1133 = vpop.f32.mrf.mxu0
        %v1134 = vadd.f32 %v1054, %v1133
        %v1135 = vpop.f32.mrf.mxu0
        %v1136 = vadd.f32 %v1054, %v1135
        %1137 = vmatmul.bf16.gmra.mxu0 %v1033
        %v1138 = vpop.f32.mrf.mxu0
        %v1139 = vadd.f32 %v1054, %v1138
        %v1140 = vpop.f32.mrf.mxu0
        %v1141 = vadd.f32 %v1054, %v1140
        %1142 = vmatmul.bf16.gmra.mxu0 %v1034
        %v1143 = vpop.f32.mrf.mxu0
        %v1144 = vadd.f32 %v1054, %v1143
        %v1145 = vpop.f32.mrf.mxu0
        %v1146 = vadd.f32 %v1054, %v1145
        %1147 = vmatmul.bf16.gmra.mxu0 %v1035
        %v1148 = vpop.f32.mrf.mxu0
        %v1149 = vadd.f32 %v1054, %v1148
        %v1150 = vpop.f32.mrf.mxu0
        %v1151 = vadd.f32 %v1054, %v1150
        %1152 = vdwg.mxu0
        %v1153 = vmax.f32 %v1114, 0.0
        %v1154 = vmax.f32 %v1116, 0.0
        %v1155 = vmax.f32 %v1119, 0.0
        %v1156 = vmax.f32 %v1121, 0.0
        %v1157 = vmax.f32 %v1124, 0.0
        %v1158 = vmax.f32 %v1126, 0.0
        %v1159 = vmax.f32 %v1129, 0.0
        %v1160 = vmax.f32 %v1131, 0.0
        %v1161 = vmax.f32 %v1134, 0.0
        %v1162 = vmax.f32 %v1136, 0.0
        %v1163 = vmax.f32 %v1139, 0.0
        %v1164 = vmax.f32 %v1141, 0.0
        %v1165 = vmax.f32 %v1144, 0.0
        %v1166 = vmax.f32 %v1146, 0.0
        %v1167 = vmax.f32 %v1149, 0.0
        %v1168 = vmax.f32 %v1151, 0.0
        %1169 = vst [vmem:[%s467] sm:$0xff] %v1153
        %1170 = vst [vmem:[%s467 + $0x8] sm:$0xff] %v1154
        %1171 = vst [vmem:[%s467 + $0x10] sm:$0xff] %v1155
        %1172 = vst [vmem:[%s467 + $0x18] sm:$0xff] %v1156
        %1173 = vst [vmem:[%s467 + $0x20] sm:$0xff] %v1157
        %1174 = vst [vmem:[%s467 + $0x28] sm:$0xff] %v1158
        %1175 = vst [vmem:[%s467 + $0x30] sm:$0xff] %v1159
        %1176 = vst [vmem:[%s467 + $0x38] sm:$0xff] %v1160
        %1177 = vst [vmem:[%s467 + $0x40] sm:$0xff] %v1161
        %1178 = vst [vmem:[%s467 + $0x48] sm:$0xff] %v1162
        %1179 = vst [vmem:[%s467 + $0x50] sm:$0xff] %v1163
        %1180 = vst [vmem:[%s467 + $0x58] sm:$0xff] %v1164
        %1181 = vst [vmem:[%s467 + $0x60] sm:$0xff] %v1165
        %1182 = vst [vmem:[%s467 + $0x68] sm:$0xff] %v1166
        %1183 = vst [vmem:[%s467 + $0x70] sm:$0xff] %v1167
        %1184 = vst [vmem:[%s467 + $0x78] sm:$0xff] %v1168
        %s1185 = smul.u32 %s38, 128
        %v1186 = vlaneseq
        %v1187 = vshrl.u32 %v1186, 7
        %v1188 = vadd.s32 %v1187, 8
        %v1189 = vadd.s32 %v1187, 16
        %v1190 = vadd.s32 %v1187, 24
        %v1191 = vadd.s32 %v1187, 32
        %v1192 = vadd.s32 %v1187, 40
        %v1193 = vadd.s32 %v1187, 48
        %v1194 = vadd.s32 %v1187, 56
        %v1195 = vadd.s32 %v1187, 64
        %v1196 = vadd.s32 %v1187, 72
        %v1197 = vadd.s32 %v1187, 80
        %v1198 = vadd.s32 %v1187, 88
        %v1199 = vadd.s32 %v1187, 96
        %v1200 = vadd.s32 %v1187, 104
        %v1201 = vadd.s32 %v1187, 112
        %v1202 = vadd.s32 %v1187, 120
        %v1203 = vstv %s1185
        %v1204 = vadd.s32 %v1203, %v1187
        %v1205 = vadd.s32 %v1203, %v1188
        %v1206 = vadd.s32 %v1203, %v1189
        %v1207 = vadd.s32 %v1203, %v1190
        %v1208 = vadd.s32 %v1203, %v1191
        %v1209 = vadd.s32 %v1203, %v1192
        %v1210 = vadd.s32 %v1203, %v1193
        %v1211 = vadd.s32 %v1203, %v1194
        %v1212 = vadd.s32 %v1203, %v1195
        %v1213 = vadd.s32 %v1203, %v1196
        %v1214 = vadd.s32 %v1203, %v1197
        %v1215 = vadd.s32 %v1203, %v1198
        %v1216 = vadd.s32 %v1203, %v1199
        %v1217 = vadd.s32 %v1203, %v1200
        %v1218 = vadd.s32 %v1203, %v1201
        %v1219 = vadd.s32 %v1203, %v1202
        %vm1220 = vcmp.lt.s32.totalorder %v1204, 200
        %vm1221 = vcmp.lt.s32.totalorder %v1205, 200
        %vm1222 = vcmp.lt.s32.totalorder %v1206, 200
        %vm1223 = vcmp.lt.s32.totalorder %v1207, 200
        %vm1224 = vcmp.lt.s32.totalorder %v1208, 200
        %vm1225 = vcmp.lt.s32.totalorder %v1209, 200
        %vm1226 = vcmp.lt.s32.totalorder %v1210, 200
        %vm1227 = vcmp.lt.s32.totalorder %v1211, 200
        %vm1228 = vcmp.lt.s32.totalorder %v1212, 200
        %vm1229 = vcmp.lt.s32.totalorder %v1213, 200
        %vm1230 = vcmp.lt.s32.totalorder %v1214, 200
        %vm1231 = vcmp.lt.s32.totalorder %v1215, 200
        %vm1232 = vcmp.lt.s32.totalorder %v1216, 200
        %vm1233 = vcmp.lt.s32.totalorder %v1217, 200
        %vm1234 = vcmp.lt.s32.totalorder %v1218, 200
        %vm1235 = vcmp.lt.s32.totalorder %v1219, 200
        %v1236 = vsel %vm1220, 1, 0
        %v1237 = vsel %vm1221, 1, 0
        %v1238 = vsel %vm1222, 1, 0
        %v1239 = vsel %vm1223, 1, 0
        %v1240 = vsel %vm1224, 1, 0
        %v1241 = vsel %vm1225, 1, 0
        %v1242 = vsel %vm1226, 1, 0
        %v1243 = vsel %vm1227, 1, 0
        %v1244 = vsel %vm1228, 1, 0
        %v1245 = vsel %vm1229, 1, 0
        %v1246 = vsel %vm1230, 1, 0
        %v1247 = vsel %vm1231, 1, 0
        %v1248 = vsel %vm1232, 1, 0
        %v1249 = vsel %vm1233, 1, 0
        %v1250 = vsel %vm1234, 1, 0
        %v1251 = vsel %vm1235, 1, 0
        %v1252 = vcvt.s32.f32 %v1236
        %v1253 = vcvt.s32.f32 %v1237
        %v1254 = vcvt.s32.f32 %v1238
        %v1255 = vcvt.s32.f32 %v1239
        %v1256 = vcvt.s32.f32 %v1240
        %v1257 = vcvt.s32.f32 %v1241
        %v1258 = vcvt.s32.f32 %v1242
        %v1259 = vcvt.s32.f32 %v1243
        %v1260 = vcvt.s32.f32 %v1244
        %v1261 = vcvt.s32.f32 %v1245
        %v1262 = vcvt.s32.f32 %v1246
        %v1263 = vcvt.s32.f32 %v1247
        %v1264 = vcvt.s32.f32 %v1248
        %v1265 = vcvt.s32.f32 %v1249
        %v1266 = vcvt.s32.f32 %v1250
        %v1267 = vcvt.s32.f32 %v1251
        %v1268 = vmul.f32 %v1153, %v1252
        %v1269 = vmul.f32 %v1154, %v1253
        %v1270 = vmul.f32 %v1155, %v1254
        %v1271 = vmul.f32 %v1156, %v1255
        %v1272 = vmul.f32 %v1157, %v1256
        %v1273 = vmul.f32 %v1158, %v1257
        %v1274 = vmul.f32 %v1159, %v1258
        %v1275 = vmul.f32 %v1160, %v1259
        %v1276 = vmul.f32 %v1161, %v1260
        %v1277 = vmul.f32 %v1162, %v1261
        %v1278 = vmul.f32 %v1163, %v1262
        %v1279 = vmul.f32 %v1164, %v1263
        %v1280 = vmul.f32 %v1165, %v1264
        %v1281 = vmul.f32 %v1166, %v1265
        %v1282 = vmul.f32 %v1167, %v1266
        %v1283 = vmul.f32 %v1168, %v1267
        %v1284 = vadd.f32 %v1268, %v1269
        %v1285 = vadd.f32 %v1284, %v1270
        %v1286 = vadd.f32 %v1285, %v1271
        %v1287 = vadd.f32 %v1286, %v1272
        %v1288 = vadd.f32 %v1287, %v1273
        %v1289 = vadd.f32 %v1288, %v1274
        %v1290 = vadd.f32 %v1289, %v1275
        %v1291 = vadd.f32 %v1290, %v1276
        %v1292 = vadd.f32 %v1291, %v1277
        %v1293 = vadd.f32 %v1292, %v1278
        %v1294 = vadd.f32 %v1293, %v1279
        %v1295 = vadd.f32 %v1294, %v1280
        %v1296 = vadd.f32 %v1295, %v1281
        %v1297 = vadd.f32 %v1296, %v1282
        %v1298 = vadd.f32 %v1297, %v1283
        %v1299 = vrot.slane %v1298, 4
        %v1300 = vadd.f32 %v1298, %v1299
        %v1301 = vrot.slane %v1300, 2
        %v1302 = vadd.f32 %v1300, %v1301
        %v1303 = vrot.slane %v1302, 1
        %v1304 = vadd.f32 %v1302, %v1303
        %1305 = vst [vmem:[%s472] sm:$0x1] %v1304
        %v1306 = vmul.f32 %v1268, %v1268
        %v1307 = vmul.f32 %v1269, %v1269
        %v1308 = vmul.f32 %v1270, %v1270
        %v1309 = vmul.f32 %v1271, %v1271
        %v1310 = vmul.f32 %v1272, %v1272
        %v1311 = vmul.f32 %v1273, %v1273
        %v1312 = vmul.f32 %v1274, %v1274
        %v1313 = vmul.f32 %v1275, %v1275
        %v1314 = vmul.f32 %v1276, %v1276
        %v1315 = vmul.f32 %v1277, %v1277
        %v1316 = vmul.f32 %v1278, %v1278
        %v1317 = vmul.f32 %v1279, %v1279
        %v1318 = vmul.f32 %v1280, %v1280
        %v1319 = vmul.f32 %v1281, %v1281
        %v1320 = vmul.f32 %v1282, %v1282
        %v1321 = vmul.f32 %v1283, %v1283
        %v1322 = vadd.f32 %v1306, %v1307
        %v1323 = vadd.f32 %v1322, %v1308
        %v1324 = vadd.f32 %v1323, %v1309
        %v1325 = vadd.f32 %v1324, %v1310
        %v1326 = vadd.f32 %v1325, %v1311
        %v1327 = vadd.f32 %v1326, %v1312
        %v1328 = vadd.f32 %v1327, %v1313
        %v1329 = vadd.f32 %v1328, %v1314
        %v1330 = vadd.f32 %v1329, %v1315
        %v1331 = vadd.f32 %v1330, %v1316
        %v1332 = vadd.f32 %v1331, %v1317
        %v1333 = vadd.f32 %v1332, %v1318
        %v1334 = vadd.f32 %v1333, %v1319
        %v1335 = vadd.f32 %v1334, %v1320
        %v1336 = vadd.f32 %v1335, %v1321
        %v1337 = vrot.slane %v1336, 4
        %v1338 = vadd.f32 %v1336, %v1337
        %v1339 = vrot.slane %v1338, 2
        %v1340 = vadd.f32 %v1338, %v1339
        %v1341 = vrot.slane %v1340, 1
        %v1342 = vadd.f32 %v1340, %v1341
        %1343 = vst [vmem:[%s472 + $0x1] sm:$0x1] %v1342
      $region56: #{gconv_forward.4} parent=43 // pred_fallthru
        _
      %s1344 = smul.u32 16, %s38
      %p1345 = scmp.lt.s32.totalorder %s1344, 31
      %s1346 = scalar_select %p1345, %s1344, 31
      %s1347 = smul.addr %s1346, 8
      %s1348 = scalar_lea.vmem %s8, %s1347
      %p1349 = scmp.lt.s32.totalorder %s38, 1
      %s1350 = scalar_select %p1349, %s38, 1
      %s1351 = smul.addr %s1350, 2
      %s1352 = scalar_lea.vmem %s9, %s1351
      // Predicated region
      $region57: #{gconv_forward.4} parent=43 // pred_check
        %p1353 = pneg %p234
      $region58: #{gconv_forward.4} parent=43 // pred_check_branch
        %1355 = sbr.rel (%p1353) target = $region60
      $region59: #{gconv_forward.4} parent=43 // pred_region
        %s1356 = smul.u32 16, %s38
      $region60: #{gconv_forward.4} parent=43 // pred_fallthru
        _
      // Predicated region
      $region61: #{gconv_forward.4} parent=43 // pred_check
        %p1357 = pneg %p260
      $region62: #{gconv_forward.4} parent=43 // pred_check_branch
        %1359 = sbr.rel (%p1357) target = $region64
      $region63: #{gconv_forward.4} parent=43 // pred_region
        _
      $region64: #{gconv_forward.4} parent=43 // pred_fallthru
        _
    $region44: #{gconv_forward.4} parent=5 // pred_fallthru
      _
    %p1360 = scmp.le.s32.totalorder 2, %s29
    // Predicated region
    $region65: #{gconv_forward.4} parent=5 // pred_check
      %p1361 = pneg %p1360
    $region66: #{gconv_forward.4} parent=5 // pred_check_branch
      %1363 = sbr.rel (%p1361) target = $region68
    $region67: #{gconv_forward.4} parent=5 // pred_region
      %s1364 = ssub.s32 %s29, 2
      // Predicated region
      $region69: #{gconv_forward.4} parent=67 // pred_check
        %p1365 = pneg %p240
      $region70: #{gconv_forward.4} parent=67 // pred_check_branch
        %1367 = sbr.rel (%p1365) target = $region72
      $region71: #{gconv_forward.4} parent=67 // pred_region
        %s1368 = smul.u32 16, %s40
        %p1369 = scmp.lt.s32.totalorder %s1368, 31
        %s1370 = scalar_select %p1369, %s1368, 31
        %s1371 = smul.addr %s1370, 8
        %s1372 = scalar_lea.vmem %s8, %s1371
      $region72: #{gconv_forward.4} parent=67 // pred_fallthru
        _
      // Predicated region
      $region73: #{gconv_forward.4} parent=67 // pred_check
        %p1373 = pneg %p266
      $region74: #{gconv_forward.4} parent=67 // pred_check_branch
        %1375 = sbr.rel (%p1373) target = $region76
      $region75: #{gconv_forward.4} parent=67 // pred_region
        %p1376 = scmp.lt.s32.totalorder %s40, 1
        %s1377 = scalar_select %p1376, %s40, 1
        %s1378 = smul.addr %s1377, 2
        %s1379 = scalar_lea.vmem %s9, %s1378
      $region76: #{gconv_forward.4} parent=67 // pred_fallthru
        _
    $region68: #{gconv_forward.4} parent=5 // pred_fallthru
      _
  $region6: #{gconv_forward.4} parent=0 // loop_footer
    %s33 = sadd.s32 1, %s29
  $region7: #{gconv_forward.4} parent=0 // loop_footer_branch
    %28 = sbr.rel target = $region3
  $region8: #{gconv_forward.4} parent=0 // loop_exit
    _

// kernel: gconv_forward.7
$region0: #{gconv_forward.7}
  #allocation0 [shape = 'u32[]', space=smem, size = 0x4, offset = 0x4, fixed_abs, tag = 'smem constant byte address 0x4 - core index']
  #allocation1 [shape = 'u32[72,128]{1,0:T(1,128)}', space=vmem, size = 0x9000, scoped, tag = 'internal scratch']
  %s0 = inlined_call_operand.vmem [shape: f32[256,128], index: 0, kind: input, shape index: {}]
  %s1 = inlined_call_operand.vmem [shape: f32[1,128], index: 1, kind: input, shape index: {}]
  %s2 = inlined_call_operand.vmem [shape: f32[1,128], index: 2, kind: input, shape index: {}]
  %s3 = inlined_call_operand.vmem [shape: f32[8,256], index: 3, kind: input, shape index: {}]
  %s4 = inlined_call_operand.vmem [shape: f32[256,256], index: 4, kind: input, shape index: {}, may-alias: {4,5}]
  %s5 = inlined_call_operand.vmem [shape: f32[256,256], index: 5, kind: output, shape index: {0}, may-alias: {4,5}]
  %s6 = inlined_call_operand.hbm [shape: bf16[256,128], index: 6, kind: output, shape index: {1}]
  %s7 = inlined_call_operand.vmem [shape: f32[2,8,128], index: 7, kind: output, shape index: {2}]
  %8 = xla_tuple %s5, %s6, %s7
  %s9 = sld [smem:[#allocation0]]
  $region99: #{gconv_forward.7} parent=0
    _
  %s11 = ssub.s32 1, %s9
  %s12 = scalar_select 0, %s11, %s9
  $region1: #{gconv_forward.7} parent=0
    #allocation2 [shape = 'u8[131072]{0}', space=vmem, size = 0x20000, scoped, tag = 'output window, operand 0']
    #allocation3 [shape = 'u8[65536]{0}', space=vmem, size = 0x10000, scoped, tag = 'output window, operand 1']
    #allocation4 [shape = 's32[2]{0}', space=sflag, size = 0x8, scoped, tag = 'scoped memory for gconv_forward.7']
    %13 = vsyncpa [#allocation4], 0
    %s14 = scalar_lea.sflag [#allocation4], 1
    %15 = vsyncpa %s14, 0
    loop: start=0, step=1, limit=4
    $region2: #{gconv_forward.7} parent=1 // loop_pre_header
      _
    $region3: #{gconv_forward.7} parent=1 // loop_header
      %s17 = sphi 0, %s21
      %p18 = scmp.ge.s32.totalorder %s17, 4
      %s27 = sphi 0, %s29
      %s30 = sphi 0, %s27
      %s31 = sphi 0, %s30
      %s47 = sphi 0, %s31
      %s51 = sphi 0, %s51
      %s53 = sphi 0, %s51
      %s54 = sphi 0, %s53
      %s68 = sphi 0, %s54
      %s72 = sphi 0, %s72
      %s74 = sphi 0, %s72
      %s75 = sphi 0, %s74
      %s89 = sphi 0, %s75
      %s95 = sphi 0, %s97
      %s98 = sphi 0, %s95
      %s99 = sphi 0, %s98
      %s115 = sphi 0, %s99
      %s121 = sphi 0, %s123
      %s124 = sphi 0, %s121
      %s125 = sphi 0, %s124
      %s141 = sphi 0, %s125
      %s147 = sphi 0, %s149
      %s150 = sphi 0, %s147
      %s151 = sphi 0, %s150
      %s167 = sphi 0, %s151
      %s173 = sphi 0, %s175
      %s176 = sphi 0, %s173
      %s177 = sphi 0, %s176
      %s193 = sphi 0, %s177
    $region4: #{gconv_forward.7} parent=1 // loop_header_branch
      %20 = sbr.rel (%p18) target = $region8
    $region5: #{gconv_forward.7} parent=1 // loop_body
      %s22 = ssub.s32 %s17, 1
      %s23 = ssub.s32 %s17, 2
      %s24 = sadd.s32 %s17, 1
      %s25 = ssub.s32 %s17, %s24
      %p26 = scmp.eq.s32.totalorder %s25, 0
      %s28 = sadd.s32 %s27, 1
      %s29 = scalar_select %p26, %s27, %s28
      %p32 = pneg %p26
      %p33 = scmp.eq.s32.totalorder %s17, 1
      %p34 = por %p32, %p33
      %p35 = scmp.ne.s32.totalorder %s27, %s30
      %p36 = scmp.eq.s32.totalorder %s17, 0
      %p37 = por %p35, %p36
      %p38 = scmp.ne.s32.totalorder %s27, %s30
      %p39 = scmp.eq.s32.totalorder %s22, 1
      %p40 = por %p38, %p39
      %p41 = scmp.ne.s32.totalorder %s30, %s31
      %p42 = scmp.eq.s32.totalorder %s22, 0
      %p43 = por %p41, %p42
      %p44 = scmp.ne.s32.totalorder %s30, %s31
      %p45 = scmp.eq.s32.totalorder %s23, 1
      %p46 = por %p44, %p45
      %p48 = scmp.ne.s32.totalorder %s31, %s47
      %p49 = scmp.eq.s32.totalorder %s23, 0
      %p50 = por %p48, %p49
      %s52 = sadd.s32 %s51, 1
      %p55 = scmp.eq.s32.totalorder %s17, 1
      %p56 = scmp.ne.s32.totalorder %s51, %s53
      %p57 = scmp.eq.s32.totalorder %s17, 0
      %p58 = por %p56, %p57
      %p59 = scmp.ne.s32.totalorder %s51, %s53
      %p60 = scmp.eq.s32.totalorder %s22, 1
      %p61 = por %p59, %p60
      %p62 = scmp.ne.s32.totalorder %s53, %s54
      %p63 = scmp.eq.s32.totalorder %s22, 0
      %p64 = por %p62, %p63
      %p65 = scmp.ne.s32.totalorder %s53, %s54
      %p66 = scmp.eq.s32.totalorder %s23, 1
      %p67 = por %p65, %p66
      %p69 = scmp.ne.s32.totalorder %s54, %s68
      %p70 = scmp.eq.s32.totalorder %s23, 0
      %p71 = por %p69, %p70
      %s73 = sadd.s32 %s72, 1
      %p76 = scmp.eq.s32.totalorder %s17, 1
      %p77 = scmp.ne.s32.totalorder %s72, %s74
      %p78 = scmp.eq.s32.totalorder %s17, 0
      %p79 = por %p77, %p78
      %p80 = scmp.ne.s32.totalorder %s72, %s74
      %p81 = scmp.eq.s32.totalorder %s22, 1
      %p82 = por %p80, %p81
      %p83 = scmp.ne.s32.totalorder %s74, %s75
      %p84 = scmp.eq.s32.totalorder %s22, 0
      %p85 = por %p83, %p84
      %p86 = scmp.ne.s32.totalorder %s74, %s75
      %p87 = scmp.eq.s32.totalorder %s23, 1
      %p88 = por %p86, %p87
      %p90 = scmp.ne.s32.totalorder %s75, %s89
      %p91 = scmp.eq.s32.totalorder %s23, 0
      %p92 = por %p90, %p91
      %s93 = ssub.s32 %s17, %s24
      %p94 = scmp.eq.s32.totalorder %s93, 0
      %s96 = sadd.s32 %s95, 1
      %s97 = scalar_select %p94, %s95, %s96
      %p100 = pneg %p94
      %p101 = scmp.eq.s32.totalorder %s17, 1
      %p102 = por %p100, %p101
      %p103 = scmp.ne.s32.totalorder %s95, %s98
      %p104 = scmp.eq.s32.totalorder %s17, 0
      %p105 = por %p103, %p104
      %p106 = scmp.ne.s32.totalorder %s95, %s98
      %p107 = scmp.eq.s32.totalorder %s22, 1
      %p108 = por %p106, %p107
      %p109 = scmp.ne.s32.totalorder %s98, %s99
      %p110 = scmp.eq.s32.totalorder %s22, 0
      %p111 = por %p109, %p110
      %p112 = scmp.ne.s32.totalorder %s98, %s99
      %p113 = scmp.eq.s32.totalorder %s23, 1
      %p114 = por %p112, %p113
      %p116 = scmp.ne.s32.totalorder %s99, %s115
      %p117 = scmp.eq.s32.totalorder %s23, 0
      %p118 = por %p116, %p117
      %s119 = ssub.s32 %s17, %s24
      %p120 = scmp.eq.s32.totalorder %s119, 0
      %s122 = sadd.s32 %s121, 1
      %s123 = scalar_select %p120, %s121, %s122
      %p126 = pneg %p120
      %p127 = scmp.eq.s32.totalorder %s17, 1
      %p128 = por %p126, %p127
      %p129 = scmp.ne.s32.totalorder %s121, %s124
      %p130 = scmp.eq.s32.totalorder %s17, 0
      %p131 = por %p129, %p130
      %p132 = scmp.ne.s32.totalorder %s121, %s124
      %p133 = scmp.eq.s32.totalorder %s22, 1
      %p134 = por %p132, %p133
      %p135 = scmp.ne.s32.totalorder %s124, %s125
      %p136 = scmp.eq.s32.totalorder %s22, 0
      %p137 = por %p135, %p136
      %p138 = scmp.ne.s32.totalorder %s124, %s125
      %p139 = scmp.eq.s32.totalorder %s23, 1
      %p140 = por %p138, %p139
      %p142 = scmp.ne.s32.totalorder %s125, %s141
      %p143 = scmp.eq.s32.totalorder %s23, 0
      %p144 = por %p142, %p143
      %s145 = ssub.s32 %s17, %s24
      %p146 = scmp.eq.s32.totalorder %s145, 0
      %s148 = sadd.s32 %s147, 1
      %s149 = scalar_select %p146, %s147, %s148
      %p152 = pneg %p146
      %p153 = scmp.eq.s32.totalorder %s17, 1
      %p154 = por %p152, %p153
      %p155 = scmp.ne.s32.totalorder %s147, %s150
      %p156 = scmp.eq.s32.totalorder %s17, 0
      %p157 = por %p155, %p156
      %p158 = scmp.ne.s32.totalorder %s147, %s150
      %p159 = scmp.eq.s32.totalorder %s22, 1
      %p160 = por %p158, %p159
      %p161 = scmp.ne.s32.totalorder %s150, %s151
      %p162 = scmp.eq.s32.totalorder %s22, 0
      %p163 = por %p161, %p162
      %p164 = scmp.ne.s32.totalorder %s150, %s151
      %p165 = scmp.eq.s32.totalorder %s23, 1
      %p166 = por %p164, %p165
      %p168 = scmp.ne.s32.totalorder %s151, %s167
      %p169 = scmp.eq.s32.totalorder %s23, 0
      %p170 = por %p168, %p169
      %s171 = ssub.s32 %s17, %s24
      %p172 = scmp.eq.s32.totalorder %s171, 0
      %s174 = sadd.s32 %s173, 1
      %s175 = scalar_select %p172, %s173, %s174
      %p178 = pneg %p172
      %p179 = scmp.eq.s32.totalorder %s17, 1
      %p180 = por %p178, %p179
      %p181 = scmp.ne.s32.totalorder %s173, %s176
      %p182 = scmp.eq.s32.totalorder %s17, 0
      %p183 = por %p181, %p182
      %p184 = scmp.ne.s32.totalorder %s173, %s176
      %p185 = scmp.eq.s32.totalorder %s22, 1
      %p186 = por %p184, %p185
      %p187 = scmp.ne.s32.totalorder %s176, %s177
      %p188 = scmp.eq.s32.totalorder %s22, 0
      %p189 = por %p187, %p188
      %p190 = scmp.ne.s32.totalorder %s176, %s177
      %p191 = scmp.eq.s32.totalorder %s23, 1
      %p192 = por %p190, %p191
      %p194 = scmp.ne.s32.totalorder %s177, %s193
      %p195 = scmp.eq.s32.totalorder %s23, 0
      %p196 = por %p194, %p195
      %p197 = scmp.le.s32.totalorder 1, %s17
      %p198 = scmp.lt.s32.totalorder %s17, 3
      %p199 = pnand %p197, %p198
      %p200 = pneg %p199
      // Predicated region
      $region9: #{gconv_forward.7} parent=5 // pred_check
        _
      $region10: #{gconv_forward.7} parent=5 // pred_check_branch
        %202 = sbr.rel (%p199) target = $region12
      $region11: #{gconv_forward.7} parent=5 // pred_region
        %s203 = ssub.s32 %s17, 1
        // Predicated region
        $region13: #{gconv_forward.7} parent=11 // pred_check
          %p204 = pneg %p64
        $region14: #{gconv_forward.7} parent=11 // pred_check_branch
          %206 = sbr.rel (%p204) target = $region16
        $region15: #{gconv_forward.7} parent=11 // pred_region
          _
        $region16: #{gconv_forward.7} parent=11 // pred_fallthru
          _
        // Predicated region
        $region17: #{gconv_forward.7} parent=11 // pred_check
          %p207 = pneg %p85
        $region18: #{gconv_forward.7} parent=11 // pred_check_branch
          %209 = sbr.rel (%p207) target = $region20
        $region19: #{gconv_forward.7} parent=11 // pred_region
          _
        $region20: #{gconv_forward.7} parent=11 // pred_fallthru
          _
      $region12: #{gconv_forward.7} parent=5 // pred_fallthru
        _
      %p210 = scmp.lt.s32.totalorder %s17, 2
      // Predicated region
      $region21: #{gconv_forward.7} parent=5 // pred_check
        %p211 = pneg %p210
      $region22: #{gconv_forward.7} parent=5 // pred_check_branch
        %213 = sbr.rel (%p211) target = $region24
      $region23: #{gconv_forward.7} parent=5 // pred_region
        // Predicated region
        $region25: #{gconv_forward.7} parent=23 // pred_check
          %p214 = pneg %p37
        $region26: #{gconv_forward.7} parent=23 // pred_check_branch
          %216 = sbr.rel (%p214) target = $region28
        $region27: #{gconv_forward.7} parent=23 // pred_region
          %s217 = smul.u32 16, %s17
          %p218 = scmp.lt.s32.totalorder %s217, 31
          %s219 = scalar_select %p218, %s217, 31
          %s220 = smul.addr %s219, 8
          %s221 = scalar_lea.vmem %s0, %s220
          %s222 = smul.u32 16, %s17
        $region28: #{gconv_forward.7} parent=23 // pred_fallthru
          _
        // Predicated region
        $region29: #{gconv_forward.7} parent=23 // pred_check
          %p223 = pneg %p105
        $region30: #{gconv_forward.7} parent=23 // pred_check_branch
          %225 = sbr.rel (%p223) target = $region32
        $region31: #{gconv_forward.7} parent=23 // pred_region
          %p226 = scmp.lt.s32.totalorder %s17, 1
          %s227 = scalar_select %p226, %s17, 1
          %s228 = smul.addr %s227, 8
          %s229 = scalar_lea.vmem %s3, %s228
        $region32: #{gconv_forward.7} parent=23 // pred_fallthru
          _
      $region24: #{gconv_forward.7} parent=5 // pred_fallthru
        _
      %p230 = scmp.le.s32.totalorder 1, %s17
      %p231 = scmp.lt.s32.totalorder %s17, 3
      %p232 = pnand %p230, %p231
      %p233 = pneg %p232
      // Predicated region
      $region33: #{gconv_forward.7} parent=5 // pred_check
        _
      $region34: #{gconv_forward.7} parent=5 // pred_check_branch
        %235 = sbr.rel (%p232) target = $region36
      $region35: #{gconv_forward.7} parent=5 // pred_region
        %s236 = ssub.s32 %s17, 1
        %s237 = smul.u32 16, %s22
        %p238 = scmp.lt.s32.totalorder %s237, 31
        %s239 = scalar_select %p238, %s237, 31
        %s240 = smul.addr %s239, 8
        %s241 = scalar_lea.vmem %s0, %s240
        %p242 = pneg %p43
        %p243 = pneg %p40
        %p244 = pneg %p64
        %p245 = pneg %p61
        %p246 = pneg %p85
        %p247 = pneg %p82
        %p248 = scmp.lt.s32.totalorder %s22, 1
        %s249 = scalar_select %p248, %s22, 1
        %s250 = smul.addr %s249, 8
        %s251 = scalar_lea.vmem %s3, %s250
        %p252 = pneg %p111
        %p253 = pneg %p108
        %p254 = pneg %p137
        %p255 = pneg %p134
        %s256 = sand.u32 %s124, 1
        %s257 = sand.u32 %s124, 1
        %s258 = smul.addr %s257, 128
        %s259 = scalar_lea.vmem [#allocation2], %s258
        %p260 = pneg %p163
        %p261 = pneg %p160
        %s262 = sand.u32 %s150, 1
        %s263 = scalar_lea.sflag [#allocation4], %s262
        %s264 = sand.u32 %s150, 1
        %s265 = smul.addr %s264, 64
        %s266 = scalar_lea.vmem [#allocation3], %s265
        %p267 = pneg %p189
        %p268 = pneg %p186
        %p269 = scmp.lt.s32.totalorder %s22, 1
        %s270 = scalar_select %p269, %s22, 1
        %s271 = smul.addr %s270, 8
        %s272 = scalar_lea.vmem %s7, %s271
        %s273 = smul.u32 16, %s22
        %p274 = scmp.lt.s32.totalorder %s273, 31
        %s275 = scalar_select %p274, %s273, 31
        %s276 = smul.addr %s275, 8
        %s277 = scalar_lea.vmem %s0, %s276
        %s278 = smul.u32 16, %s22
        %p279 = scmp.lt.s32.totalorder %s22, 1
        %s280 = scalar_select %p279, %s22, 1
        %s281 = smul.addr %s280, 8
        %s282 = scalar_lea.vmem %s3, %s281
        %s283 = smul.u32 16, %s22
        %s284 = smul.u32 16, %s22
        %p285 = scmp.lt.s32.totalorder %s22, 1
        %s286 = scalar_select %p285, %s22, 1
        %s287 = smul.addr %s286, 8
        %s288 = scalar_lea.vmem %s7, %s287
        %v289 = vld [vmem:[%s277] sm:$0xff]
        %v290 = vld [vmem:[%s277 + $0x8] sm:$0xff]
        %v291 = vld [vmem:[%s277 + $0x10] sm:$0xff]
        %v292 = vld [vmem:[%s277 + $0x18] sm:$0xff]
        %v293 = vld [vmem:[%s277 + $0x20] sm:$0xff]
        %v294 = vld [vmem:[%s277 + $0x28] sm:$0xff]
        %v295 = vld [vmem:[%s277 + $0x30] sm:$0xff]
        %v296 = vld [vmem:[%s277 + $0x38] sm:$0xff]
        %v297 = vld [vmem:[%s277 + $0x40] sm:$0xff]
        %v298 = vld [vmem:[%s277 + $0x48] sm:$0xff]
        %v299 = vld [vmem:[%s277 + $0x50] sm:$0xff]
        %v300 = vld [vmem:[%s277 + $0x58] sm:$0xff]
        %v301 = vld [vmem:[%s277 + $0x60] sm:$0xff]
        %v302 = vld [vmem:[%s277 + $0x68] sm:$0xff]
        %v303 = vld [vmem:[%s277 + $0x70] sm:$0xff]
        %v304 = vld [vmem:[%s277 + $0x78] sm:$0xff]
        %v305 = vld [vmem:[%s1] sm:$0x1]
        %v307 = vperm.slane %v305, 0
        %v309 = vmul.f32 %v289, %v307
        %v310 = vmul.f32 %v290, %v307
        %v311 = vmul.f32 %v291, %v307
        %v312 = vmul.f32 %v292, %v307
        %v313 = vmul.f32 %v293, %v307
        %v314 = vmul.f32 %v294, %v307
        %v315 = vmul.f32 %v295, %v307
        %v316 = vmul.f32 %v296, %v307
        %v317 = vmul.f32 %v297, %v307
        %v318 = vmul.f32 %v298, %v307
        %v319 = vmul.f32 %v299, %v307
        %v320 = vmul.f32 %v300, %v307
        %v321 = vmul.f32 %v301, %v307
        %v322 = vmul.f32 %v302, %v307
        %v323 = vmul.f32 %v303, %v307
        %v324 = vmul.f32 %v304, %v307
        %v325 = vld [vmem:[%s2] sm:$0x1]
        %v327 = vperm.slane %v325, 0
        %v329 = vadd.f32 %v309, %v327
        %v330 = vadd.f32 %v310, %v327
        %v331 = vadd.f32 %v311, %v327
        %v332 = vadd.f32 %v312, %v327
        %v333 = vadd.f32 %v313, %v327
        %v334 = vadd.f32 %v314, %v327
        %v335 = vadd.f32 %v315, %v327
        %v336 = vadd.f32 %v316, %v327
        %v337 = vadd.f32 %v317, %v327
        %v338 = vadd.f32 %v318, %v327
        %v339 = vadd.f32 %v319, %v327
        %v340 = vadd.f32 %v320, %v327
        %v341 = vadd.f32 %v321, %v327
        %v342 = vadd.f32 %v322, %v327
        %v343 = vadd.f32 %v323, %v327
        %v344 = vadd.f32 %v324, %v327
        %345 = vst [vmem:[%s259] sm:$0xff] %v329
        %346 = vst [vmem:[%s259 + $0x8] sm:$0xff] %v330
        %347 = vst [vmem:[%s259 + $0x10] sm:$0xff] %v331
        %348 = vst [vmem:[%s259 + $0x18] sm:$0xff] %v332
        %349 = vst [vmem:[%s259 + $0x20] sm:$0xff] %v333
        %350 = vst [vmem:[%s259 + $0x28] sm:$0xff] %v334
        %351 = vst [vmem:[%s259 + $0x30] sm:$0xff] %v335
        %352 = vst [vmem:[%s259 + $0x38] sm:$0xff] %v336
        %353 = vst [vmem:[%s259 + $0x40] sm:$0xff] %v337
        %354 = vst [vmem:[%s259 + $0x48] sm:$0xff] %v338
        %355 = vst [vmem:[%s259 + $0x50] sm:$0xff] %v339
        %356 = vst [vmem:[%s259 + $0x58] sm:$0xff] %v340
        %357 = vst [vmem:[%s259 + $0x60] sm:$0xff] %v341
        %358 = vst [vmem:[%s259 + $0x68] sm:$0xff] %v342
        %359 = vst [vmem:[%s259 + $0x70] sm:$0xff] %v343
        %360 = vst [vmem:[%s259 + $0x78] sm:$0xff] %v344
        %v361 = vpack.c.bf16 %v329, %v329
        %v362 = vpack.c.bf16 %v330, %v330
        %v363 = vpack.c.bf16 %v331, %v331
        %v364 = vpack.c.bf16 %v332, %v332
        %v365 = vpack.c.bf16 %v333, %v333
        %v366 = vpack.c.bf16 %v334, %v334
        %v367 = vpack.c.bf16 %v335, %v335
        %v368 = vpack.c.bf16 %v336, %v336
        %v369 = vpack.c.bf16 %v337, %v337
        %v370 = vpack.c.bf16 %v338, %v338
        %v371 = vpack.c.bf16 %v339, %v339
        %v372 = vpack.c.bf16 %v340, %v340
        %v373 = vpack.c.bf16 %v341, %v341
        %v374 = vpack.c.bf16 %v342, %v342
        %v375 = vpack.c.bf16 %v343, %v343
        %v376 = vpack.c.bf16 %v344, %v344
        %377 = vst [vmem:[%s266] sm:$0xf] %v361
        %378 = vst [vmem:[%s266 + $0x4] sm:$0xf] %v362
        %379 = vst [vmem:[%s266 + $0x8] sm:$0xf] %v363
        %380 = vst [vmem:[%s266 + $0xc] sm:$0xf] %v364
        %381 = vst [vmem:[%s266 + $0x10] sm:$0xf] %v365
        %382 = vst [vmem:[%s266 + $0x14] sm:$0xf] %v366
        %383 = vst [vmem:[%s266 + $0x18] sm:$0xf] %v367
        %384 = vst [vmem:[%s266 + $0x1c] sm:$0xf] %v368
        %385 = vst [vmem:[%s266 + $0x20] sm:$0xf] %v369
        %386 = vst [vmem:[%s266 + $0x24] sm:$0xf] %v370
        %387 = vst [vmem:[%s266 + $0x28] sm:$0xf] %v371
        %388 = vst [vmem:[%s266 + $0x2c] sm:$0xf] %v372
        %389 = vst [vmem:[%s266 + $0x30] sm:$0xf] %v373
        %390 = vst [vmem:[%s266 + $0x34] sm:$0xf] %v374
        %391 = vst [vmem:[%s266 + $0x38] sm:$0xf] %v375
        %392 = vst [vmem:[%s266 + $0x3c] sm:$0xf] %v376
        %v393 = vld [vmem:[%s282] sm:$0xff]
        %394 = vmatpush.msra.mxu0 %v344
        %395 = vmatpush.msra.mxu0 %v343
        %396 = vmatpush.msra.mxu0 %v342
        %397 = vmatpush.msra.mxu0 %v341
        %398 = vmatpush.msra.mxu0 %v340
        %399 = vmatpush.msra.mxu0 %v339
        %400 = vmatpush.msra.mxu0 %v338
        %401 = vmatpush.msra.mxu0 %v337
        %402 = vmatpush.msra.mxu0 %v336
        %403 = vmatpush.msra.mxu0 %v335
        %404 = vmatpush.msra.mxu0 %v334
        %405 = vmatpush.msra.mxu0 %v333
        %406 = vmatpush.msra.mxu0 %v332
        %407 = vmatpush.msra.mxu0 %v331
        %408 = vmatpush.msra.mxu0 %v330
        %409 = vmatpush.msra.mxu0 %v329
        %410 = vmatmul.f32.gmra.mxu0 %v393
        %v411 = vpop.f32.mrf.mxu0
        %v412 = vadd.f32 0.0, %v411
        %413 = vdwg.mxu0
        %414 = vst [vmem:[%s288] sm:$0xff] %v412
        %s415 = sand.u32 %s124, 1
        %s416 = sand.u32 %s124, 1
        %s417 = smul.addr %s416, 128
        %s418 = scalar_lea.vmem [#allocation2], %s417
        %s419 = sand.u32 %s150, 1
        %s420 = scalar_lea.sflag [#allocation4], %s419
        %s421 = sand.u32 %s150, 1
        %s422 = smul.addr %s421, 64
        %s423 = scalar_lea.vmem [#allocation3], %s422
        %p424 = scmp.lt.s32.totalorder %s22, 1
        %s425 = scalar_select %p424, %s22, 1
        %s426 = smul.addr %s425, 8
        %s427 = scalar_lea.vmem %s7, %s426
        // Predicated region
        $region37: #{gconv_forward.7} parent=35 // pred_check
          %p428 = pneg %p134
        $region38: #{gconv_forward.7} parent=35 // pred_check_branch
          %430 = sbr.rel (%p428) target = $region40
        $region39: #{gconv_forward.7} parent=35 // pred_region
          %s431 = smul.u32 16, %s22
          %s432 = smul.addr %s431, 2
          %s433 = sadd.s32 1, %s432
          %s434 = smul.addr %s433, 8
          %s435 = scalar_lea.vmem %s5, %s434
          // Predicated region
          $region41: #{gconv_forward.7} parent=39 // pred_check
            _
          $region42: #{gconv_forward.7} parent=39 // pred_check_branch
            %437 = sbr.rel (0) target = $region44
          $region43: #{gconv_forward.7} parent=39 // pred_region
            // Predicated region
            $region45: #{gconv_forward.7} parent=43 // pred_check
              _
            $region46: #{gconv_forward.7} parent=43 // pred_check_branch
              %439 = sbr.rel (0) target = $region48
            $region47: #{gconv_forward.7} parent=43 // pred_region
              // Predicated region
              $region60: #{gconv_forward.7} parent=47 // pred_check
                _
              $region61: #{gconv_forward.7} parent=47 // pred_check_branch
                %485 = sbr.rel (0) target = $region63
              $region62: #{gconv_forward.7} parent=47 // pred_region
                loop: start=0, step=1, limit=1
                $region64: #{gconv_forward.7} parent=62 // loop_pre_header
                  _
                $region65: #{gconv_forward.7} parent=62 // loop_header
                  %s487 = sphi 0, %s491
                  %p488 = scmp.ge.s32.totalorder %s487, 1
                  %s492 = sphi %s418, %s418
                  %s493 = sphi %s435, %s435
                $region66: #{gconv_forward.7} parent=62 // loop_header_branch
                  %490 = sbr.rel (%p488) target = $region70
                $region67: #{gconv_forward.7} parent=62 // loop_body
                  %v494 = vld [vmem:[%s492] sm:$0xff]
                  %495 = vst [vmem:[%s493] sm:$0xff] %v494
                  %v496 = vld [vmem:[%s492 + $0x8] sm:$0xff]
                  %497 = vst [vmem:[%s493 + $0x10] sm:$0xff] %v496
                  %v498 = vld [vmem:[%s492 + $0x10] sm:$0xff]
                  %499 = vst [vmem:[%s493 + $0x20] sm:$0xff] %v498
                  %v500 = vld [vmem:[%s492 + $0x18] sm:$0xff]
                  %501 = vst [vmem:[%s493 + $0x30] sm:$0xff] %v500
                  %v502 = vld [vmem:[%s492 + $0x20] sm:$0xff]
                  %503 = vst [vmem:[%s493 + $0x40] sm:$0xff] %v502
                  %v504 = vld [vmem:[%s492 + $0x28] sm:$0xff]
                  %505 = vst [vmem:[%s493 + $0x50] sm:$0xff] %v504
                  %v506 = vld [vmem:[%s492 + $0x30] sm:$0xff]
                  %507 = vst [vmem:[%s493 + $0x60] sm:$0xff] %v506
                  %v508 = vld [vmem:[%s492 + $0x38] sm:$0xff]
                  %509 = vst [vmem:[%s493 + $0x70] sm:$0xff] %v508
                  %v510 = vld [vmem:[%s492 + $0x40] sm:$0xff]
                  %511 = vst [vmem:[%s493 + $0x80] sm:$0xff] %v510
                  %v512 = vld [vmem:[%s492 + $0x48] sm:$0xff]
                  %513 = vst [vmem:[%s493 + $0x90] sm:$0xff] %v512
                  %v514 = vld [vmem:[%s492 + $0x50] sm:$0xff]
                  %515 = vst [vmem:[%s493 + $0xa0] sm:$0xff] %v514
                  %v516 = vld [vmem:[%s492 + $0x58] sm:$0xff]
                  %517 = vst [vmem:[%s493 + $0xb0] sm:$0xff] %v516
                  %v518 = vld [vmem:[%s492 + $0x60] sm:$0xff]
                  %519 = vst [vmem:[%s493 + $0xc0] sm:$0xff] %v518
                  %v520 = vld [vmem:[%s492 + $0x68] sm:$0xff]
                  %521 = vst [vmem:[%s493 + $0xd0] sm:$0xff] %v520
                  %v522 = vld [vmem:[%s492 + $0x70] sm:$0xff]
                  %523 = vst [vmem:[%s493 + $0xe0] sm:$0xff] %v522
                  %v524 = vld [vmem:[%s492 + $0x78] sm:$0xff]
                  %525 = vst [vmem:[%s493 + $0xf0] sm:$0xff] %v524
                $region68: #{gconv_forward.7} parent=62 // loop_footer
                  %s491 = sadd.s32 1, %s487
                $region69: #{gconv_forward.7} parent=62 // loop_footer_branch
                  %486 = sbr.rel target = $region65
                $region70: #{gconv_forward.7} parent=62 // loop_exit
                  _
              $region63: #{gconv_forward.7} parent=47 // pred_fallthru
                _
              // Predicated region
              $region71: #{gconv_forward.7} parent=47 // pred_check
                _
              $region72: #{gconv_forward.7} parent=47 // pred_check_branch
                %527 = sbr.rel target = $region74
              $region73: #{gconv_forward.7} parent=47 // pred_region
                _
              $region74: #{gconv_forward.7} parent=47 // pred_fallthru
                _
            $region48: #{gconv_forward.7} parent=43 // pred_fallthru
              _
            // Predicated region
            $region49: #{gconv_forward.7} parent=43 // pred_check
              _
            $region50: #{gconv_forward.7} parent=43 // pred_check_branch
              %441 = sbr.rel target = $region52
            $region51: #{gconv_forward.7} parent=43 // pred_region
              %s443 = ssub.s32 256, 1
              loop: start=0, step=1, limit=1
              $region53: #{gconv_forward.7} parent=51 // loop_pre_header
                _
              $region54: #{gconv_forward.7} parent=51 // loop_header
                %s445 = sphi 0, %s449
                %p446 = scmp.ge.s32.totalorder %s445, 1
                %s450 = sphi %s418, %s418
                %s451 = sphi %s435, %s435
              $region55: #{gconv_forward.7} parent=51 // loop_header_branch
                %448 = sbr.rel (%p446) target = $region59
              $region56: #{gconv_forward.7} parent=51 // loop_body
                %v452 = vld [vmem:[%s450] sm:%s443]
                %453 = vst [vmem:[%s451] sm:%s443] %v452
                %v454 = vld [vmem:[%s450 + $0x8] sm:%s443]
                %455 = vst [vmem:[%s451 + $0x10] sm:%s443] %v454
                %v456 = vld [vmem:[%s450 + $0x10] sm:%s443]
                %457 = vst [vmem:[%s451 + $0x20] sm:%s443] %v456
                %v458 = vld [vmem:[%s450 + $0x18] sm:%s443]
                %459 = vst [vmem:[%s451 + $0x30] sm:%s443] %v458
                %v460 = vld [vmem:[%s450 + $0x20] sm:%s443]
                %461 = vst [vmem:[%s451 + $0x40] sm:%s443] %v460
                %v462 = vld [vmem:[%s450 + $0x28] sm:%s443]
                %463 = vst [vmem:[%s451 + $0x50] sm:%s443] %v462
                %v464 = vld [vmem:[%s450 + $0x30] sm:%s443]
                %465 = vst [vmem:[%s451 + $0x60] sm:%s443] %v464
                %v466 = vld [vmem:[%s450 + $0x38] sm:%s443]
                %467 = vst [vmem:[%s451 + $0x70] sm:%s443] %v466
                %v468 = vld [vmem:[%s450 + $0x40] sm:%s443]
                %469 = vst [vmem:[%s451 + $0x80] sm:%s443] %v468
                %v470 = vld [vmem:[%s450 + $0x48] sm:%s443]
                %471 = vst [vmem:[%s451 + $0x90] sm:%s443] %v470
                %v472 = vld [vmem:[%s450 + $0x50] sm:%s443]
                %473 = vst [vmem:[%s451 + $0xa0] sm:%s443] %v472
                %v474 = vld [vmem:[%s450 + $0x58] sm:%s443]
                %475 = vst [vmem:[%s451 + $0xb0] sm:%s443] %v474
                %v476 = vld [vmem:[%s450 + $0x60] sm:%s443]
                %477 = vst [vmem:[%s451 + $0xc0] sm:%s443] %v476
                %v478 = vld [vmem:[%s450 + $0x68] sm:%s443]
                %479 = vst [vmem:[%s451 + $0xd0] sm:%s443] %v478
                %v480 = vld [vmem:[%s450 + $0x70] sm:%s443]
                %481 = vst [vmem:[%s451 + $0xe0] sm:%s443] %v480
                %v482 = vld [vmem:[%s450 + $0x78] sm:%s443]
                %483 = vst [vmem:[%s451 + $0xf0] sm:%s443] %v482
              $region57: #{gconv_forward.7} parent=51 // loop_footer
                %s449 = sadd.s32 1, %s445
              $region58: #{gconv_forward.7} parent=51 // loop_footer_branch
                %444 = sbr.rel target = $region54
              $region59: #{gconv_forward.7} parent=51 // loop_exit
                _
            $region52: #{gconv_forward.7} parent=43 // pred_fallthru
              _
          $region44: #{gconv_forward.7} parent=39 // pred_fallthru
            _
          %528 = vnop
        $region40: #{gconv_forward.7} parent=35 // pred_fallthru
          _
        // Predicated region
        $region75: #{gconv_forward.7} parent=35 // pred_check
          %p529 = pneg %p160
        $region76: #{gconv_forward.7} parent=35 // pred_check_branch
          %531 = sbr.rel (%p529) target = $region78
        $region77: #{gconv_forward.7} parent=35 // pred_region
          %s532 = smul.u32 16, %s22
          %534 = vsyncadd %s420, 0
          %s535 = smul.addr %s532, 4
          %s536 = scalar_lea.hbm %s6, %s535
          %s537 = sshll.u32 %s423, 4
          %s538 = int_to_ptr.vmem [resolvable:$true] %s537
          %s539 = sshll.u32 %s536, 4
          %s540 = int_to_ptr.hbm [resolvable:$true] %s539
          %545 = dma.vmem_to_hbm [thread:$0]  %s538, 1024, %s540, %s420, 64, 64, 4
        $region78: #{gconv_forward.7} parent=35 // pred_fallthru
          _
        // Predicated region
        $region79: #{gconv_forward.7} parent=35 // pred_check
          %p546 = pneg %p186
        $region80: #{gconv_forward.7} parent=35 // pred_check_branch
          %548 = sbr.rel (%p546) target = $region82
        $region81: #{gconv_forward.7} parent=35 // pred_region
          _
        $region82: #{gconv_forward.7} parent=35 // pred_fallthru
          _
      $region36: #{gconv_forward.7} parent=5 // pred_fallthru
        _
      %p549 = scmp.le.s32.totalorder 2, %s17
      // Predicated region
      $region83: #{gconv_forward.7} parent=5 // pred_check
        %p550 = pneg %p549
      $region84: #{gconv_forward.7} parent=5 // pred_check_branch
        %552 = sbr.rel (%p550) target = $region86
      $region85: #{gconv_forward.7} parent=5 // pred_region
        %s553 = ssub.s32 %s17, 2
        // Predicated region
        $region87: #{gconv_forward.7} parent=85 // pred_check
          %p554 = pneg %p140
        $region88: #{gconv_forward.7} parent=85 // pred_check_branch
          %556 = sbr.rel (%p554) target = $region90
        $region89: #{gconv_forward.7} parent=85 // pred_region
          %s557 = sand.u32 %s125, 1
          %s558 = sand.u32 %s125, 1
          %s559 = smul.addr %s558, 128
          %s560 = scalar_lea.vmem [#allocation2], %s559
        $region90: #{gconv_forward.7} parent=85 // pred_fallthru
          _
        // Predicated region
        $region91: #{gconv_forward.7} parent=85 // pred_check
          %p561 = pneg %p166
        $region92: #{gconv_forward.7} parent=85 // pred_check_branch
          %563 = sbr.rel (%p561) target = $region94
        $region93: #{gconv_forward.7} parent=85 // pred_region
          %s564 = sand.u32 %s151, 1
          %s565 = scalar_lea.sflag [#allocation4], %s564
          %s566 = sand.u32 %s151, 1
          %s567 = smul.addr %s566, 64
          %s568 = scalar_lea.vmem [#allocation3], %s567
          %570 = dma.done %s565, 1024
        $region94: #{gconv_forward.7} parent=85 // pred_fallthru
          _
        // Predicated region
        $region95: #{gconv_forward.7} parent=85 // pred_check
          %p571 = pneg %p192
        $region96: #{gconv_forward.7} parent=85 // pred_check_branch
          %573 = sbr.rel (%p571) target = $region98
        $region97: #{gconv_forward.7} parent=85 // pred_region
          %p574 = scmp.lt.s32.totalorder %s23, 1
          %s575 = scalar_select %p574, %s23, 1
          %s576 = smul.addr %s575, 8
          %s577 = scalar_lea.vmem %s7, %s576
        $region98: #{gconv_forward.7} parent=85 // pred_fallthru
          _
      $region86: #{gconv_forward.7} parent=5 // pred_fallthru
        _
    $region6: #{gconv_forward.7} parent=1 // loop_footer
      %s21 = sadd.s32 1, %s17
    $region7: #{gconv_forward.7} parent=1 // loop_footer_branch
      %16 = sbr.rel target = $region3
    $region8: #{gconv_forward.7} parent=1 // loop_exit
      _
    %578 = vsyncpa [#allocation4], 1
    %s579 = scalar_lea.sflag [#allocation4], 1
    %580 = vsyncpa %s579, 1

</llo_original>
